<compile_context>
chip_gen: v7x
topology: tpu7x:2x2x1
jax: 0.10.0
libtpu: 0.0.40
codegen_flags: <defaults>
</compile_context>

<pallas_src>
import jax
import jax.numpy as jnp
from jax import lax
from jax.experimental import pallas as pl
from jax.experimental.pallas import tpu as pltpu
import numpy as np

# ---------------------------------------------------------------------------
# problem sizes (small, consistent with the module)
# ---------------------------------------------------------------------------
N, CIN, H, W = 2, 4, 16, 16
EXPAND, COUT, K, STRIDE = 16, 8, 3, 1     # kernel implements STRIDE == 1 only
HW = H * W
NHW = N * HW                              # batch packed onto the lane axis
BN_EPS = 1e-5

# constant-slab layout: (32, NHW) f32
#   rows 0..7   : 8 depthwise boundary-mask rows (taps in (dh,dw) row-major order, center skipped)
#   rows 8..31  : weight/bias columns (only the leading lanes are meaningful):
SLAB_ROWS = 32
_ROW_W = 8          # first weight row
_LANE_WF0 = 0       # lanes 0..3 : fused [conv1 | shortcut] 1x1 weight columns (24 rows)
_LANE_BF = 4        # lane 4     : fused bias  [b1 (16) ; 0 (8)]
_LANE_WD0 = 8       # lanes 8..16: depthwise tap k weight column (16 rows each)
_LANE_B2 = 17       # lane 17    : depthwise BN bias b2 (16 rows)
_LANE_W3 = 32       # lanes 32..47: project-conv weight columns w3f[:, e] (8 rows each)
_LANE_B3 = 48       # lane 48    : final bias b3 + bsc (8 rows)


# ---------------------------------------------------------------------------
# Pallas kernel: whole Block forward, single invocation, channels-first layout
# ---------------------------------------------------------------------------
def block_kernel(x_ref,    # (CIN, NHW)
                 c_ref,    # (SLAB_ROWS, NHW) constant slab: masks + weights + biases
                 out_ref): # (COUT, NHW)
    x = x_ref[...]                                                     # (4, 512)

    # ---- fused conv1 (1x1 expand, rows 0..15) + shortcut conv (rows 16..23) ----
    # VPU broadcast-FMA over CIN=4 (a 4-deep contraction would waste the MXU and
    # leave its fill/drain latency fully exposed on v5e/v6e).
    fused = c_ref[_ROW_W:_ROW_W + EXPAND + COUT, _LANE_BF:_LANE_BF + 1]      # (24,1) bias
    for c in range(CIN):
        fused = fused + (c_ref[_ROW_W:_ROW_W + EXPAND + COUT, c:c + 1]       # (24,1)
                         * x[c:c + 1, :])                                    # (1,512)
    h1 = jnp.maximum(fused[0:EXPAND, :], 0.0)                                # (16,512) ReLU
    sc = fused[EXPAND:EXPAND + COUT, :]                                      # (8,512)

    # ---- depthwise 3x3 (stride 1, SAME): 8 XLU rolls along the packed lane axis ----
    # Host-precomputed mask rows (functions of pos % HW) zero both the image-border
    # taps and any cross-image bleed from the roll wrap-around: one multiply per tap,
    # no in-kernel iota/compare/select.
    acc = c_ref[_ROW_W:_ROW_W + EXPAND, _LANE_B2:_LANE_B2 + 1]               # (16,1) b2
    m = 0
    for dh in (-1, 0, 1):
        for dw in (-1, 0, 1):
            k = (dh + 1) * K + (dw + 1)
            off = dh * W + dw
            wcol = c_ref[_ROW_W:_ROW_W + EXPAND,
                         _LANE_WD0 + k:_LANE_WD0 + k + 1]                    # (16,1)
            if off == 0:
                acc = acc + h1 * wcol
            else:
                # tap[p] = h1[(p + off) mod NHW]; out-of-image taps are masked to 0
                tap = pltpu.roll(h1, shift=(-off) % NHW, axis=1)
                acc = acc + (tap * c_ref[m:m + 1, :]) * wcol
                m += 1
    h2 = jnp.maximum(acc, 0.0)                                               # (16,512) ReLU

    # ---- conv3 (1x1 project, VPU FMA over E=16) + (b3 + bsc) + residual shortcut ----
    out = sc + c_ref[_ROW_W:_ROW_W + COUT, _LANE_B3:_LANE_B3 + 1]            # (8,512)
    for e in range(EXPAND):
        out = out + (c_ref[_ROW_W:_ROW_W + COUT, _LANE_W3 + e:_LANE_W3 + e + 1]
                     * h2[e:e + 1, :])
    out_ref[...] = out


@jax.jit
def block_forward(x_nchw, cslab):
    # Pack the batch onto the lane axis: (N,CIN,H,W) -> (CIN, N*HW).  8 KiB transpose,
    # trivial; keeps the kernel a single lane-dense step.
    x2 = jnp.transpose(x_nchw.astype(jnp.float32), (1, 0, 2, 3)).reshape(CIN, NHW)
    out2 = pl.pallas_call(
        block_kernel,
        out_shape=jax.ShapeDtypeStruct((COUT, NHW), jnp.float32),
        in_specs=[pl.BlockSpec(memory_space=pltpu.MemorySpace.VMEM),
                  pl.BlockSpec(memory_space=pltpu.MemorySpace.VMEM)],
        out_specs=pl.BlockSpec(memory_space=pltpu.MemorySpace.VMEM),
    )(x2, cslab)
    return jnp.transpose(out2.reshape(COUT, N, H, W), (1, 0, 2, 3))


# ---------------------------------------------------------------------------
# deterministic parameter construction + BN folding (host side, exact)
# ---------------------------------------------------------------------------
def fold_bn(key, c):
    kg, kb, km, kv = jax.random.split(key, 4)
    gamma = 1.0 + 0.1 * jax.random.normal(kg, (c,), jnp.float32)
    beta = 0.1 * jax.random.normal(kb, (c,), jnp.float32)
    mean = 0.1 * jax.random.normal(km, (c,), jnp.float32)
    var = jnp.abs(1.0 + 0.1 * jax.random.normal(kv, (c,), jnp.float32))
    scale = gamma / jnp.sqrt(var + BN_EPS)
    bias = beta - mean * scale
    return scale, bias


def make_params(key):
    ks = jax.random.split(key, 8)
    w1 = 0.1 * jax.random.normal(ks[0], (EXPAND, CIN), jnp.float32)    # conv1 (E,CIN,1,1)
    wd = 0.1 * jax.random.normal(ks[1], (EXPAND, K, K), jnp.float32)   # conv2 (E,1,K,K)
    w3 = 0.1 * jax.random.normal(ks[2], (COUT, EXPAND), jnp.float32)   # conv3 (COUT,E,1,1)
    wsc = 0.1 * jax.random.normal(ks[3], (COUT, CIN), jnp.float32)     # shortcut (COUT,CIN,1,1)
    s1, b1 = fold_bn(ks[4], EXPAND)
    s2, b2 = fold_bn(ks[5], EXPAND)
    s3, b3 = fold_bn(ks[6], COUT)
    ssc, bsc = fold_bn(ks[7], COUT)
    return (w1, s1, b1, wd, s2, b2, w3, s3, b3, wsc, ssc, bsc)


def fold_params(raw):
    """Fold inference-mode BN scales into the conv weights (mathematically exact)."""
    (w1, s1, b1, wd, s2, b2, w3, s3, b3, wsc, ssc, bsc) = raw
    w1f = w1 * s1[:, None]                 # (E, CIN)
    wdf = wd * s2[:, None, None]           # (E, K, K)
    w3f = w3 * s3[:, None]                 # (COUT, E)
    wscf = wsc * ssc[:, None]              # (COUT, CIN)
    bfinal = b3 + bsc                      # (COUT,)  project bias + shortcut bias
    return w1f, b1, wdf, b2, w3f, bfinal, wscf


def prepare_kernel_params(folded):
    """Pack all constants (masks + folded weights/biases) into one (32, NHW) slab."""
    w1f, b1, wdf, b2, w3f, bfinal, wscf = [np.asarray(a, np.float32) for a in folded]
    slab = np.zeros((SLAB_ROWS, NHW), np.float32)

    # rows 0..7: boundary masks per non-center tap, computed from (pos % HW) so the
    # same mask kills both image-border taps and cross-image bleed of the lane rolls.
    pos = np.arange(NHW)
    hh = (pos % HW) // W
    ww = (pos % HW) % W
    m = 0
    for dh in (-1, 0, 1):
        for dw in (-1, 0, 1):
            if dh == 0 and dw == 0:
                continue
            ok = np.ones(NHW, dtype=bool)
            if dh == -1:
                ok &= hh >= 1
            if dh == 1:
                ok &= hh <= H - 2
            if dw == -1:
                ok &= ww >= 1
            if dw == 1:
                ok &= ww <= W - 2
            slab[m, :] = ok.astype(np.float32)
            m += 1

    # rows 8..31: weight / bias columns
    wf = np.concatenate([w1f, wscf], axis=0)                                   # (24, 4)
    slab[_ROW_W:_ROW_W + EXPAND + COUT, _LANE_WF0:_LANE_WF0 + CIN] = wf
    slab[_ROW_W:_ROW_W + EXPAND, _LANE_BF] = b1                                # shortcut rows stay 0
    slab[_ROW_W:_ROW_W + EXPAND, _LANE_WD0:_LANE_WD0 + K * K] = wdf.reshape(EXPAND, K * K)
    slab[_ROW_W:_ROW_W + EXPAND, _LANE_B2] = b2
    slab[_ROW_W:_ROW_W + COUT, _LANE_W3:_LANE_W3 + EXPAND] = w3f
    slab[_ROW_W:_ROW_W + COUT, _LANE_B3] = bfinal
    return jnp.asarray(slab)


# ---------------------------------------------------------------------------
# pure-JAX reference (NCHW, same folded weights -> faithful module forward)
# ---------------------------------------------------------------------------
def reference_forward(x_nchw, folded):
    w1f, b1, wdf, b2, w3f, bfinal, wscf = folded
    x = x_nchw.astype(jnp.float32)                                             # NCHW
    h = jnp.einsum('nchw,ec->nehw', x, w1f) + b1[:, None, None]
    h = jnp.maximum(h, 0.0)
    h = lax.conv_general_dilated(
        h, wdf.reshape(EXPAND, 1, K, K),
        window_strides=(1, 1), padding='SAME',
        dimension_numbers=('NCHW', 'OIHW', 'NCHW'),
        feature_group_count=EXPAND)
    h = jnp.maximum(h + b2[:, None, None], 0.0)
    out = jnp.einsum('nehw,oe->nohw', h, w3f) + bfinal[:, None, None]
    out = out + jnp.einsum('nchw,oc->nohw', x, wscf)
    return out


# ---------------------------------------------------------------------------
if __name__ == "__main__":
    key = jax.random.PRNGKey(0)
    kx, kp = jax.random.split(key)
    x = jax.random.normal(kx, (N, CIN, H, W), jnp.float32)       # NCHW like PyTorch
    raw = make_params(kp)
    folded = fold_params(raw)
    cslab = prepare_kernel_params(folded)

    out = jax.block_until_ready(block_forward(x, cslab))
    ref = jax.block_until_ready(reference_forward(x, folded))

    assert out.shape == (N, COUT, H, W), out.shape
    np.testing.assert_allclose(np.asarray(out), np.asarray(ref),
                               rtol=5e-4, atol=5e-4)
    print("KERNEL_OK")
</pallas_src>

<mosaic_0001>
module attributes {stable_mosaic.version = 11 : i64} {
  func.func @block_kernel(%arg0: memref<4x512xf32, #tpu.memory_space<vmem>>, %arg1: memref<32x512xf32, #tpu.memory_space<vmem>>, %arg2: memref<8x512xf32, #tpu.memory_space<vmem>>) attributes {dimension_semantics = [], scalar_prefetch = 0 : i64, scratch_operands = 0 : i64, tpu.core_type = #tpu.core_type<tc>} {
    %c0 = arith.constant 0 : index
    %c0_0 = arith.constant 0 : index
    %0 = vector.load %arg0[%c0, %c0_0] : memref<4x512xf32, #tpu.memory_space<vmem>>, vector<4x512xf32>
    %c8 = arith.constant 8 : index
    %c4 = arith.constant 4 : index
    %1 = vector.load %arg1[%c8, %c4] : memref<32x512xf32, #tpu.memory_space<vmem>>, vector<24x1xf32>
    %c8_1 = arith.constant 8 : index
    %c0_2 = arith.constant 0 : index
    %2 = vector.load %arg1[%c8_1, %c0_2] : memref<32x512xf32, #tpu.memory_space<vmem>>, vector<24x1xf32>
    %3 = vector.extract_strided_slice %0 {offsets = [0, 0], sizes = [1, 512], strides = [1, 1]} : vector<4x512xf32> to vector<1x512xf32>
    %4 = vector.broadcast %2 : vector<24x1xf32> to vector<24x512xf32>
    %5 = vector.broadcast %3 : vector<1x512xf32> to vector<24x512xf32>
    %6 = arith.mulf %4, %5 : vector<24x512xf32>
    %7 = vector.broadcast %1 : vector<24x1xf32> to vector<24x512xf32>
    %8 = arith.addf %7, %6 : vector<24x512xf32>
    %c8_3 = arith.constant 8 : index
    %c1 = arith.constant 1 : index
    %9 = vector.load %arg1[%c8_3, %c1] : memref<32x512xf32, #tpu.memory_space<vmem>>, vector<24x1xf32>
    %10 = vector.extract_strided_slice %0 {offsets = [1, 0], sizes = [1, 512], strides = [1, 1]} : vector<4x512xf32> to vector<1x512xf32>
    %11 = vector.broadcast %9 : vector<24x1xf32> to vector<24x512xf32>
    %12 = vector.broadcast %10 : vector<1x512xf32> to vector<24x512xf32>
    %13 = arith.mulf %11, %12 : vector<24x512xf32>
    %14 = arith.addf %8, %13 : vector<24x512xf32>
    %c8_4 = arith.constant 8 : index
    %c2 = arith.constant 2 : index
    %15 = vector.load %arg1[%c8_4, %c2] : memref<32x512xf32, #tpu.memory_space<vmem>>, vector<24x1xf32>
    %16 = vector.extract_strided_slice %0 {offsets = [2, 0], sizes = [1, 512], strides = [1, 1]} : vector<4x512xf32> to vector<1x512xf32>
    %17 = vector.broadcast %15 : vector<24x1xf32> to vector<24x512xf32>
    %18 = vector.broadcast %16 : vector<1x512xf32> to vector<24x512xf32>
    %19 = arith.mulf %17, %18 : vector<24x512xf32>
    %20 = arith.addf %14, %19 : vector<24x512xf32>
    %c8_5 = arith.constant 8 : index
    %c3 = arith.constant 3 : index
    %21 = vector.load %arg1[%c8_5, %c3] : memref<32x512xf32, #tpu.memory_space<vmem>>, vector<24x1xf32>
    %22 = vector.extract_strided_slice %0 {offsets = [3, 0], sizes = [1, 512], strides = [1, 1]} : vector<4x512xf32> to vector<1x512xf32>
    %23 = vector.broadcast %21 : vector<24x1xf32> to vector<24x512xf32>
    %24 = vector.broadcast %22 : vector<1x512xf32> to vector<24x512xf32>
    %25 = arith.mulf %23, %24 : vector<24x512xf32>
    %26 = arith.addf %20, %25 : vector<24x512xf32>
    %27 = vector.extract_strided_slice %26 {offsets = [0, 0], sizes = [16, 512], strides = [1, 1]} : vector<24x512xf32> to vector<16x512xf32>
    %cst = arith.constant 0.000000e+00 : f32
    %28 = vector.broadcast %cst : f32 to vector<16x512xf32>
    %29 = arith.maximumf %27, %28 : vector<16x512xf32>
    %30 = vector.extract_strided_slice %26 {offsets = [16, 0], sizes = [8, 512], strides = [1, 1]} : vector<24x512xf32> to vector<8x512xf32>
    %c8_6 = arith.constant 8 : index
    %c17 = arith.constant 17 : index
    %31 = vector.load %arg1[%c8_6, %c17] : memref<32x512xf32, #tpu.memory_space<vmem>>, vector<16x1xf32>
    %c8_7 = arith.constant 8 : index
    %c8_8 = arith.constant 8 : index
    %32 = vector.load %arg1[%c8_7, %c8_8] : memref<32x512xf32, #tpu.memory_space<vmem>>, vector<16x1xf32>
    %c17_i32 = arith.constant 17 : i32
    %33 = tpu.dynamic_rotate %29 by %c17_i32 dim 1 : vector<16x512xf32>, i32 -> vector<16x512xf32>
    %c0_9 = arith.constant 0 : index
    %c0_10 = arith.constant 0 : index
    %34 = vector.load %arg1[%c0_9, %c0_10] : memref<32x512xf32, #tpu.memory_space<vmem>>, vector<1x512xf32>
    %35 = vector.broadcast %34 : vector<1x512xf32> to vector<16x512xf32>
    %36 = arith.mulf %33, %35 : vector<16x512xf32>
    %37 = vector.broadcast %32 : vector<16x1xf32> to vector<16x512xf32>
    %38 = arith.mulf %36, %37 : vector<16x512xf32>
    %39 = vector.broadcast %31 : vector<16x1xf32> to vector<16x512xf32>
    %40 = arith.addf %39, %38 : vector<16x512xf32>
    %c8_11 = arith.constant 8 : index
    %c9 = arith.constant 9 : index
    %41 = vector.load %arg1[%c8_11, %c9] : memref<32x512xf32, #tpu.memory_space<vmem>>, vector<16x1xf32>
    %c16_i32 = arith.constant 16 : i32
    %42 = tpu.dynamic_rotate %29 by %c16_i32 dim 1 : vector<16x512xf32>, i32 -> vector<16x512xf32>
    %c1_12 = arith.constant 1 : index
    %c0_13 = arith.constant 0 : index
    %43 = vector.load %arg1[%c1_12, %c0_13] : memref<32x512xf32, #tpu.memory_space<vmem>>, vector<1x512xf32>
    %44 = vector.broadcast %43 : vector<1x512xf32> to vector<16x512xf32>
    %45 = arith.mulf %42, %44 : vector<16x512xf32>
    %46 = vector.broadcast %41 : vector<16x1xf32> to vector<16x512xf32>
    %47 = arith.mulf %45, %46 : vector<16x512xf32>
    %48 = arith.addf %40, %47 : vector<16x512xf32>
    %c8_14 = arith.constant 8 : index
    %c10 = arith.constant 10 : index
    %49 = vector.load %arg1[%c8_14, %c10] : memref<32x512xf32, #tpu.memory_space<vmem>>, vector<16x1xf32>
    %c15_i32 = arith.constant 15 : i32
    %50 = tpu.dynamic_rotate %29 by %c15_i32 dim 1 : vector<16x512xf32>, i32 -> vector<16x512xf32>
    %c2_15 = arith.constant 2 : index
    %c0_16 = arith.constant 0 : index
    %51 = vector.load %arg1[%c2_15, %c0_16] : memref<32x512xf32, #tpu.memory_space<vmem>>, vector<1x512xf32>
    %52 = vector.broadcast %51 : vector<1x512xf32> to vector<16x512xf32>
    %53 = arith.mulf %50, %52 : vector<16x512xf32>
    %54 = vector.broadcast %49 : vector<16x1xf32> to vector<16x512xf32>
    %55 = arith.mulf %53, %54 : vector<16x512xf32>
    %56 = arith.addf %48, %55 : vector<16x512xf32>
    %c8_17 = arith.constant 8 : index
    %c11 = arith.constant 11 : index
    %57 = vector.load %arg1[%c8_17, %c11] : memref<32x512xf32, #tpu.memory_space<vmem>>, vector<16x1xf32>
    %c1_i32 = arith.constant 1 : i32
    %58 = tpu.dynamic_rotate %29 by %c1_i32 dim 1 : vector<16x512xf32>, i32 -> vector<16x512xf32>
    %c3_18 = arith.constant 3 : index
    %c0_19 = arith.constant 0 : index
    %59 = vector.load %arg1[%c3_18, %c0_19] : memref<32x512xf32, #tpu.memory_space<vmem>>, vector<1x512xf32>
    %60 = vector.broadcast %59 : vector<1x512xf32> to vector<16x512xf32>
    %61 = arith.mulf %58, %60 : vector<16x512xf32>
    %62 = vector.broadcast %57 : vector<16x1xf32> to vector<16x512xf32>
    %63 = arith.mulf %61, %62 : vector<16x512xf32>
    %64 = arith.addf %56, %63 : vector<16x512xf32>
    %c8_20 = arith.constant 8 : index
    %c12 = arith.constant 12 : index
    %65 = vector.load %arg1[%c8_20, %c12] : memref<32x512xf32, #tpu.memory_space<vmem>>, vector<16x1xf32>
    %66 = vector.broadcast %65 : vector<16x1xf32> to vector<16x512xf32>
    %67 = arith.mulf %29, %66 : vector<16x512xf32>
    %68 = arith.addf %64, %67 : vector<16x512xf32>
    %c8_21 = arith.constant 8 : index
    %c13 = arith.constant 13 : index
    %69 = vector.load %arg1[%c8_21, %c13] : memref<32x512xf32, #tpu.memory_space<vmem>>, vector<16x1xf32>
    %c511_i32 = arith.constant 511 : i32
    %70 = tpu.dynamic_rotate %29 by %c511_i32 dim 1 : vector<16x512xf32>, i32 -> vector<16x512xf32>
    %c4_22 = arith.constant 4 : index
    %c0_23 = arith.constant 0 : index
    %71 = vector.load %arg1[%c4_22, %c0_23] : memref<32x512xf32, #tpu.memory_space<vmem>>, vector<1x512xf32>
    %72 = vector.broadcast %71 : vector<1x512xf32> to vector<16x512xf32>
    %73 = arith.mulf %70, %72 : vector<16x512xf32>
    %74 = vector.broadcast %69 : vector<16x1xf32> to vector<16x512xf32>
    %75 = arith.mulf %73, %74 : vector<16x512xf32>
    %76 = arith.addf %68, %75 : vector<16x512xf32>
    %c8_24 = arith.constant 8 : index
    %c14 = arith.constant 14 : index
    %77 = vector.load %arg1[%c8_24, %c14] : memref<32x512xf32, #tpu.memory_space<vmem>>, vector<16x1xf32>
    %c497_i32 = arith.constant 497 : i32
    %78 = tpu.dynamic_rotate %29 by %c497_i32 dim 1 : vector<16x512xf32>, i32 -> vector<16x512xf32>
    %c5 = arith.constant 5 : index
    %c0_25 = arith.constant 0 : index
    %79 = vector.load %arg1[%c5, %c0_25] : memref<32x512xf32, #tpu.memory_space<vmem>>, vector<1x512xf32>
    %80 = vector.broadcast %79 : vector<1x512xf32> to vector<16x512xf32>
    %81 = arith.mulf %78, %80 : vector<16x512xf32>
    %82 = vector.broadcast %77 : vector<16x1xf32> to vector<16x512xf32>
    %83 = arith.mulf %81, %82 : vector<16x512xf32>
    %84 = arith.addf %76, %83 : vector<16x512xf32>
    %c8_26 = arith.constant 8 : index
    %c15 = arith.constant 15 : index
    %85 = vector.load %arg1[%c8_26, %c15] : memref<32x512xf32, #tpu.memory_space<vmem>>, vector<16x1xf32>
    %c496_i32 = arith.constant 496 : i32
    %86 = tpu.dynamic_rotate %29 by %c496_i32 dim 1 : vector<16x512xf32>, i32 -> vector<16x512xf32>
    %c6 = arith.constant 6 : index
    %c0_27 = arith.constant 0 : index
    %87 = vector.load %arg1[%c6, %c0_27] : memref<32x512xf32, #tpu.memory_space<vmem>>, vector<1x512xf32>
    %88 = vector.broadcast %87 : vector<1x512xf32> to vector<16x512xf32>
    %89 = arith.mulf %86, %88 : vector<16x512xf32>
    %90 = vector.broadcast %85 : vector<16x1xf32> to vector<16x512xf32>
    %91 = arith.mulf %89, %90 : vector<16x512xf32>
    %92 = arith.addf %84, %91 : vector<16x512xf32>
    %c8_28 = arith.constant 8 : index
    %c16 = arith.constant 16 : index
    %93 = vector.load %arg1[%c8_28, %c16] : memref<32x512xf32, #tpu.memory_space<vmem>>, vector<16x1xf32>
    %c495_i32 = arith.constant 495 : i32
    %94 = tpu.dynamic_rotate %29 by %c495_i32 dim 1 : vector<16x512xf32>, i32 -> vector<16x512xf32>
    %c7 = arith.constant 7 : index
    %c0_29 = arith.constant 0 : index
    %95 = vector.load %arg1[%c7, %c0_29] : memref<32x512xf32, #tpu.memory_space<vmem>>, vector<1x512xf32>
    %96 = vector.broadcast %95 : vector<1x512xf32> to vector<16x512xf32>
    %97 = arith.mulf %94, %96 : vector<16x512xf32>
    %98 = vector.broadcast %93 : vector<16x1xf32> to vector<16x512xf32>
    %99 = arith.mulf %97, %98 : vector<16x512xf32>
    %100 = arith.addf %92, %99 : vector<16x512xf32>
    %cst_30 = arith.constant 0.000000e+00 : f32
    %101 = vector.broadcast %cst_30 : f32 to vector<16x512xf32>
    %102 = arith.maximumf %100, %101 : vector<16x512xf32>
    %c8_31 = arith.constant 8 : index
    %c48 = arith.constant 48 : index
    %103 = vector.load %arg1[%c8_31, %c48] : memref<32x512xf32, #tpu.memory_space<vmem>>, vector<8x1xf32>
    %104 = vector.broadcast %103 : vector<8x1xf32> to vector<8x512xf32>
    %105 = arith.addf %30, %104 : vector<8x512xf32>
    %c8_32 = arith.constant 8 : index
    %c32 = arith.constant 32 : index
    %106 = vector.load %arg1[%c8_32, %c32] : memref<32x512xf32, #tpu.memory_space<vmem>>, vector<8x1xf32>
    %107 = vector.extract_strided_slice %102 {offsets = [0, 0], sizes = [1, 512], strides = [1, 1]} : vector<16x512xf32> to vector<1x512xf32>
    %108 = vector.broadcast %106 : vector<8x1xf32> to vector<8x512xf32>
    %109 = vector.broadcast %107 : vector<1x512xf32> to vector<8x512xf32>
    %110 = arith.mulf %108, %109 : vector<8x512xf32>
    %111 = arith.addf %105, %110 : vector<8x512xf32>
    %c8_33 = arith.constant 8 : index
    %c33 = arith.constant 33 : index
    %112 = vector.load %arg1[%c8_33, %c33] : memref<32x512xf32, #tpu.memory_space<vmem>>, vector<8x1xf32>
    %113 = vector.extract_strided_slice %102 {offsets = [1, 0], sizes = [1, 512], strides = [1, 1]} : vector<16x512xf32> to vector<1x512xf32>
    %114 = vector.broadcast %112 : vector<8x1xf32> to vector<8x512xf32>
    %115 = vector.broadcast %113 : vector<1x512xf32> to vector<8x512xf32>
    %116 = arith.mulf %114, %115 : vector<8x512xf32>
    %117 = arith.addf %111, %116 : vector<8x512xf32>
    %c8_34 = arith.constant 8 : index
    %c34 = arith.constant 34 : index
    %118 = vector.load %arg1[%c8_34, %c34] : memref<32x512xf32, #tpu.memory_space<vmem>>, vector<8x1xf32>
    %119 = vector.extract_strided_slice %102 {offsets = [2, 0], sizes = [1, 512], strides = [1, 1]} : vector<16x512xf32> to vector<1x512xf32>
    %120 = vector.broadcast %118 : vector<8x1xf32> to vector<8x512xf32>
    %121 = vector.broadcast %119 : vector<1x512xf32> to vector<8x512xf32>
    %122 = arith.mulf %120, %121 : vector<8x512xf32>
    %123 = arith.addf %117, %122 : vector<8x512xf32>
    %c8_35 = arith.constant 8 : index
    %c35 = arith.constant 35 : index
    %124 = vector.load %arg1[%c8_35, %c35] : memref<32x512xf32, #tpu.memory_space<vmem>>, vector<8x1xf32>
    %125 = vector.extract_strided_slice %102 {offsets = [3, 0], sizes = [1, 512], strides = [1, 1]} : vector<16x512xf32> to vector<1x512xf32>
    %126 = vector.broadcast %124 : vector<8x1xf32> to vector<8x512xf32>
    %127 = vector.broadcast %125 : vector<1x512xf32> to vector<8x512xf32>
    %128 = arith.mulf %126, %127 : vector<8x512xf32>
    %129 = arith.addf %123, %128 : vector<8x512xf32>
    %c8_36 = arith.constant 8 : index
    %c36 = arith.constant 36 : index
    %130 = vector.load %arg1[%c8_36, %c36] : memref<32x512xf32, #tpu.memory_space<vmem>>, vector<8x1xf32>
    %131 = vector.extract_strided_slice %102 {offsets = [4, 0], sizes = [1, 512], strides = [1, 1]} : vector<16x512xf32> to vector<1x512xf32>
    %132 = vector.broadcast %130 : vector<8x1xf32> to vector<8x512xf32>
    %133 = vector.broadcast %131 : vector<1x512xf32> to vector<8x512xf32>
    %134 = arith.mulf %132, %133 : vector<8x512xf32>
    %135 = arith.addf %129, %134 : vector<8x512xf32>
    %c8_37 = arith.constant 8 : index
    %c37 = arith.constant 37 : index
    %136 = vector.load %arg1[%c8_37, %c37] : memref<32x512xf32, #tpu.memory_space<vmem>>, vector<8x1xf32>
    %137 = vector.extract_strided_slice %102 {offsets = [5, 0], sizes = [1, 512], strides = [1, 1]} : vector<16x512xf32> to vector<1x512xf32>
    %138 = vector.broadcast %136 : vector<8x1xf32> to vector<8x512xf32>
    %139 = vector.broadcast %137 : vector<1x512xf32> to vector<8x512xf32>
    %140 = arith.mulf %138, %139 : vector<8x512xf32>
    %141 = arith.addf %135, %140 : vector<8x512xf32>
    %c8_38 = arith.constant 8 : index
    %c38 = arith.constant 38 : index
    %142 = vector.load %arg1[%c8_38, %c38] : memref<32x512xf32, #tpu.memory_space<vmem>>, vector<8x1xf32>
    %143 = vector.extract_strided_slice %102 {offsets = [6, 0], sizes = [1, 512], strides = [1, 1]} : vector<16x512xf32> to vector<1x512xf32>
    %144 = vector.broadcast %142 : vector<8x1xf32> to vector<8x512xf32>
    %145 = vector.broadcast %143 : vector<1x512xf32> to vector<8x512xf32>
    %146 = arith.mulf %144, %145 : vector<8x512xf32>
    %147 = arith.addf %141, %146 : vector<8x512xf32>
    %c8_39 = arith.constant 8 : index
    %c39 = arith.constant 39 : index
    %148 = vector.load %arg1[%c8_39, %c39] : memref<32x512xf32, #tpu.memory_space<vmem>>, vector<8x1xf32>
    %149 = vector.extract_strided_slice %102 {offsets = [7, 0], sizes = [1, 512], strides = [1, 1]} : vector<16x512xf32> to vector<1x512xf32>
    %150 = vector.broadcast %148 : vector<8x1xf32> to vector<8x512xf32>
    %151 = vector.broadcast %149 : vector<1x512xf32> to vector<8x512xf32>
    %152 = arith.mulf %150, %151 : vector<8x512xf32>
    %153 = arith.addf %147, %152 : vector<8x512xf32>
    %c8_40 = arith.constant 8 : index
    %c40 = arith.constant 40 : index
    %154 = vector.load %arg1[%c8_40, %c40] : memref<32x512xf32, #tpu.memory_space<vmem>>, vector<8x1xf32>
    %155 = vector.extract_strided_slice %102 {offsets = [8, 0], sizes = [1, 512], strides = [1, 1]} : vector<16x512xf32> to vector<1x512xf32>
    %156 = vector.broadcast %154 : vector<8x1xf32> to vector<8x512xf32>
    %157 = vector.broadcast %155 : vector<1x512xf32> to vector<8x512xf32>
    %158 = arith.mulf %156, %157 : vector<8x512xf32>
    %159 = arith.addf %153, %158 : vector<8x512xf32>
    %c8_41 = arith.constant 8 : index
    %c41 = arith.constant 41 : index
    %160 = vector.load %arg1[%c8_41, %c41] : memref<32x512xf32, #tpu.memory_space<vmem>>, vector<8x1xf32>
    %161 = vector.extract_strided_slice %102 {offsets = [9, 0], sizes = [1, 512], strides = [1, 1]} : vector<16x512xf32> to vector<1x512xf32>
    %162 = vector.broadcast %160 : vector<8x1xf32> to vector<8x512xf32>
    %163 = vector.broadcast %161 : vector<1x512xf32> to vector<8x512xf32>
    %164 = arith.mulf %162, %163 : vector<8x512xf32>
    %165 = arith.addf %159, %164 : vector<8x512xf32>
    %c8_42 = arith.constant 8 : index
    %c42 = arith.constant 42 : index
    %166 = vector.load %arg1[%c8_42, %c42] : memref<32x512xf32, #tpu.memory_space<vmem>>, vector<8x1xf32>
    %167 = vector.extract_strided_slice %102 {offsets = [10, 0], sizes = [1, 512], strides = [1, 1]} : vector<16x512xf32> to vector<1x512xf32>
    %168 = vector.broadcast %166 : vector<8x1xf32> to vector<8x512xf32>
    %169 = vector.broadcast %167 : vector<1x512xf32> to vector<8x512xf32>
    %170 = arith.mulf %168, %169 : vector<8x512xf32>
    %171 = arith.addf %165, %170 : vector<8x512xf32>
    %c8_43 = arith.constant 8 : index
    %c43 = arith.constant 43 : index
    %172 = vector.load %arg1[%c8_43, %c43] : memref<32x512xf32, #tpu.memory_space<vmem>>, vector<8x1xf32>
    %173 = vector.extract_strided_slice %102 {offsets = [11, 0], sizes = [1, 512], strides = [1, 1]} : vector<16x512xf32> to vector<1x512xf32>
    %174 = vector.broadcast %172 : vector<8x1xf32> to vector<8x512xf32>
    %175 = vector.broadcast %173 : vector<1x512xf32> to vector<8x512xf32>
    %176 = arith.mulf %174, %175 : vector<8x512xf32>
    %177 = arith.addf %171, %176 : vector<8x512xf32>
    %c8_44 = arith.constant 8 : index
    %c44 = arith.constant 44 : index
    %178 = vector.load %arg1[%c8_44, %c44] : memref<32x512xf32, #tpu.memory_space<vmem>>, vector<8x1xf32>
    %179 = vector.extract_strided_slice %102 {offsets = [12, 0], sizes = [1, 512], strides = [1, 1]} : vector<16x512xf32> to vector<1x512xf32>
    %180 = vector.broadcast %178 : vector<8x1xf32> to vector<8x512xf32>
    %181 = vector.broadcast %179 : vector<1x512xf32> to vector<8x512xf32>
    %182 = arith.mulf %180, %181 : vector<8x512xf32>
    %183 = arith.addf %177, %182 : vector<8x512xf32>
    %c8_45 = arith.constant 8 : index
    %c45 = arith.constant 45 : index
    %184 = vector.load %arg1[%c8_45, %c45] : memref<32x512xf32, #tpu.memory_space<vmem>>, vector<8x1xf32>
    %185 = vector.extract_strided_slice %102 {offsets = [13, 0], sizes = [1, 512], strides = [1, 1]} : vector<16x512xf32> to vector<1x512xf32>
    %186 = vector.broadcast %184 : vector<8x1xf32> to vector<8x512xf32>
    %187 = vector.broadcast %185 : vector<1x512xf32> to vector<8x512xf32>
    %188 = arith.mulf %186, %187 : vector<8x512xf32>
    %189 = arith.addf %183, %188 : vector<8x512xf32>
    %c8_46 = arith.constant 8 : index
    %c46 = arith.constant 46 : index
    %190 = vector.load %arg1[%c8_46, %c46] : memref<32x512xf32, #tpu.memory_space<vmem>>, vector<8x1xf32>
    %191 = vector.extract_strided_slice %102 {offsets = [14, 0], sizes = [1, 512], strides = [1, 1]} : vector<16x512xf32> to vector<1x512xf32>
    %192 = vector.broadcast %190 : vector<8x1xf32> to vector<8x512xf32>
    %193 = vector.broadcast %191 : vector<1x512xf32> to vector<8x512xf32>
    %194 = arith.mulf %192, %193 : vector<8x512xf32>
    %195 = arith.addf %189, %194 : vector<8x512xf32>
    %c8_47 = arith.constant 8 : index
    %c47 = arith.constant 47 : index
    %196 = vector.load %arg1[%c8_47, %c47] : memref<32x512xf32, #tpu.memory_space<vmem>>, vector<8x1xf32>
    %197 = vector.extract_strided_slice %102 {offsets = [15, 0], sizes = [1, 512], strides = [1, 1]} : vector<16x512xf32> to vector<1x512xf32>
    %198 = vector.broadcast %196 : vector<8x1xf32> to vector<8x512xf32>
    %199 = vector.broadcast %197 : vector<1x512xf32> to vector<8x512xf32>
    %200 = arith.mulf %198, %199 : vector<8x512xf32>
    %201 = arith.addf %195, %200 : vector<8x512xf32>
    %c0_48 = arith.constant 0 : index
    %c0_49 = arith.constant 0 : index
    %202 = vector.load %arg2[%c0_48, %c0_49] : memref<8x512xf32, #tpu.memory_space<vmem>>, vector<8x512xf32>
    tpu.vector_store %arg2[%c0_48, %c0_49], %201 {strides = array<i32>} : memref<8x512xf32, #tpu.memory_space<vmem>>, vector<8x512xf32>,
    return
  }
}

</mosaic_0001>

<llo_original>
// kernel: block_forward.1
$region0: #{block_forward.1}
  #allocation0 [shape = 'u32[]', space=smem, size = 0x4, offset = 0x4, fixed_abs, tag = 'smem constant byte address 0x4 - core index']
  #allocation1 [shape = 'u32[144,128]{1,0:T(1,128)}', space=vmem, size = 0x12000, scoped, tag = 'internal scratch']
  %s0 = inlined_call_operand.vmem [shape: f32[4,512], index: 0, kind: input, shape index: {}]
  %s1 = inlined_call_operand.vmem [shape: f32[32,512], index: 1, kind: input, shape index: {}]
  %s2 = inlined_call_operand.vmem [shape: f32[8,512], index: 2, kind: output, shape index: {}]
  %s3 = sld [smem:[#allocation0]]
  $region18: #{block_forward.1} parent=0
    _
  %s5 = ssub.s32 1, %s3
  %s6 = scalar_select 0, %s5, %s3
  // Predicated region
  $region2: #{block_forward.1} parent=0 // pred_check
    _
  $region3: #{block_forward.1} parent=0 // pred_check_branch
    %8 = sbr.rel (0) target = $region5
  $region4: #{block_forward.1} parent=0 // pred_region
    _
  $region5: #{block_forward.1} parent=0 // pred_fallthru
    _
  // Predicated region
  $region6: #{block_forward.1} parent=0 // pred_check
    _
  $region7: #{block_forward.1} parent=0 // pred_check_branch
    %10 = sbr.rel (0) target = $region9
  $region8: #{block_forward.1} parent=0 // pred_region
    _
  $region9: #{block_forward.1} parent=0 // pred_fallthru
    _
  %v11 = vld [vmem:[%s0] sm:$0xff]
  %v12 = vld [vmem:[%s0 + $0x8] sm:$0xff]
  %v13 = vld [vmem:[%s1 + $0x20] sm:$0xff]
  %v14 = vld [vmem:[%s1 + $0x40] sm:$0xff]
  %v15 = vld [vmem:[%s1 + $0x60] sm:$0xff]
  %17 = vset.pattern.permute.xlu0 0
  %18 = vperm.xlu0 %17, %v13
  %v19 = vpop.permute.xlu0 %18
  %22 = vset.pattern.permute.xlu0 0
  %23 = vperm.xlu0 %22, %v14
  %v24 = vpop.permute.xlu0 %23
  %27 = vset.pattern.permute.xlu0 0
  %28 = vperm.xlu0 %27, %v15
  %v29 = vpop.permute.xlu0 %28
  %v33 = vlaneseq
  %v34 = vshrl.u32 %v33, 7
  %v35 = vsub.s32 0, %v34
  %v36 = vrot.slane %v11, %v35
  %v37 = vlaneseq
  %v38 = vshrl.u32 %v37, 7
  %v39 = vsub.s32 4, %v38
  %v40 = vrot.slane %v11, %v39
  %v41 = vlaneseq
  %v42 = vshrl.u32 %v41, 7
  %v43 = vsub.s32 0, %v42
  %v44 = vrot.slane %v12, %v43
  %v45 = vlaneseq
  %v46 = vshrl.u32 %v45, 7
  %v47 = vsub.s32 4, %v46
  %v48 = vrot.slane %v12, %v47
  %v53 = vlaneseq
  %v54 = vshrl.u32 %v53, 7
  %v55 = vsub.s32 0, %v54
  %v56 = vrot.slane %v36, %v55
  %v57 = vlaneseq
  %v58 = vshrl.u32 %v57, 7
  %v59 = vsub.s32 0, %v58
  %v60 = vrot.slane %v40, %v59
  %v61 = vlaneseq
  %v62 = vshrl.u32 %v61, 7
  %v63 = vsub.s32 0, %v62
  %v64 = vrot.slane %v44, %v63
  %v65 = vlaneseq
  %v66 = vshrl.u32 %v65, 7
  %v67 = vsub.s32 0, %v66
  %v68 = vrot.slane %v48, %v67
  %v69 = vmul.f32 %v19, %v56
  %v70 = vmul.f32 %v19, %v60
  %v71 = vmul.f32 %v19, %v64
  %v72 = vmul.f32 %v19, %v68
  %v73 = vmul.f32 %v24, %v56
  %v74 = vmul.f32 %v24, %v60
  %v75 = vmul.f32 %v24, %v64
  %v76 = vmul.f32 %v24, %v68
  %v77 = vmul.f32 %v29, %v56
  %v78 = vmul.f32 %v29, %v60
  %v79 = vmul.f32 %v29, %v64
  %v80 = vmul.f32 %v29, %v68
  %81 = vset.pattern.permute.xlu0 4
  %82 = vperm.xlu0 %81, %v13
  %v83 = vpop.permute.xlu0 %82
  %85 = vset.pattern.permute.xlu0 4
  %86 = vperm.xlu0 %85, %v14
  %v87 = vpop.permute.xlu0 %86
  %89 = vset.pattern.permute.xlu0 4
  %90 = vperm.xlu0 %89, %v15
  %v91 = vpop.permute.xlu0 %90
  %v93 = vadd.f32 %v83, %v69
  %v94 = vadd.f32 %v83, %v70
  %v95 = vadd.f32 %v83, %v71
  %v96 = vadd.f32 %v83, %v72
  %v97 = vadd.f32 %v87, %v73
  %v98 = vadd.f32 %v87, %v74
  %v99 = vadd.f32 %v87, %v75
  %v100 = vadd.f32 %v87, %v76
  %v101 = vadd.f32 %v91, %v77
  %v102 = vadd.f32 %v91, %v78
  %v103 = vadd.f32 %v91, %v79
  %v104 = vadd.f32 %v91, %v80
  %105 = vset.pattern.permute.xlu0 1
  %106 = vperm.xlu0 %105, %v13
  %v107 = vpop.permute.xlu0 %106
  %109 = vset.pattern.permute.xlu0 1
  %110 = vperm.xlu0 %109, %v14
  %v111 = vpop.permute.xlu0 %110
  %113 = vset.pattern.permute.xlu0 1
  %114 = vperm.xlu0 %113, %v15
  %v115 = vpop.permute.xlu0 %114
  %v117 = vlaneseq
  %v118 = vshrl.u32 %v117, 7
  %v119 = vsub.s32 1, %v118
  %v120 = vrot.slane %v11, %v119
  %v121 = vlaneseq
  %v122 = vshrl.u32 %v121, 7
  %v123 = vsub.s32 5, %v122
  %v124 = vrot.slane %v11, %v123
  %v125 = vlaneseq
  %v126 = vshrl.u32 %v125, 7
  %v127 = vsub.s32 1, %v126
  %v128 = vrot.slane %v12, %v127
  %v129 = vlaneseq
  %v130 = vshrl.u32 %v129, 7
  %v131 = vsub.s32 5, %v130
  %v132 = vrot.slane %v12, %v131
  %v137 = vlaneseq
  %v138 = vshrl.u32 %v137, 7
  %v139 = vsub.s32 1, %v138
  %v140 = vrot.slane %v120, %v139
  %v141 = vlaneseq
  %v142 = vshrl.u32 %v141, 7
  %v143 = vsub.s32 1, %v142
  %v144 = vrot.slane %v124, %v143
  %v145 = vlaneseq
  %v146 = vshrl.u32 %v145, 7
  %v147 = vsub.s32 1, %v146
  %v148 = vrot.slane %v128, %v147
  %v149 = vlaneseq
  %v150 = vshrl.u32 %v149, 7
  %v151 = vsub.s32 1, %v150
  %v152 = vrot.slane %v132, %v151
  %v153 = vmul.f32 %v107, %v140
  %v154 = vmul.f32 %v107, %v144
  %v155 = vmul.f32 %v107, %v148
  %v156 = vmul.f32 %v107, %v152
  %v157 = vmul.f32 %v111, %v140
  %v158 = vmul.f32 %v111, %v144
  %v159 = vmul.f32 %v111, %v148
  %v160 = vmul.f32 %v111, %v152
  %v161 = vmul.f32 %v115, %v140
  %v162 = vmul.f32 %v115, %v144
  %v163 = vmul.f32 %v115, %v148
  %v164 = vmul.f32 %v115, %v152
  %v165 = vadd.f32 %v93, %v153
  %v166 = vadd.f32 %v94, %v154
  %v167 = vadd.f32 %v95, %v155
  %v168 = vadd.f32 %v96, %v156
  %v169 = vadd.f32 %v97, %v157
  %v170 = vadd.f32 %v98, %v158
  %v171 = vadd.f32 %v99, %v159
  %v172 = vadd.f32 %v100, %v160
  %v173 = vadd.f32 %v101, %v161
  %v174 = vadd.f32 %v102, %v162
  %v175 = vadd.f32 %v103, %v163
  %v176 = vadd.f32 %v104, %v164
  %177 = vset.pattern.permute.xlu0 2
  %178 = vperm.xlu0 %177, %v13
  %v179 = vpop.permute.xlu0 %178
  %181 = vset.pattern.permute.xlu0 2
  %182 = vperm.xlu0 %181, %v14
  %v183 = vpop.permute.xlu0 %182
  %185 = vset.pattern.permute.xlu0 2
  %186 = vperm.xlu0 %185, %v15
  %v187 = vpop.permute.xlu0 %186
  %v189 = vlaneseq
  %v190 = vshrl.u32 %v189, 7
  %v191 = vsub.s32 2, %v190
  %v192 = vrot.slane %v11, %v191
  %v193 = vlaneseq
  %v194 = vshrl.u32 %v193, 7
  %v195 = vsub.s32 6, %v194
  %v196 = vrot.slane %v11, %v195
  %v197 = vlaneseq
  %v198 = vshrl.u32 %v197, 7
  %v199 = vsub.s32 2, %v198
  %v200 = vrot.slane %v12, %v199
  %v201 = vlaneseq
  %v202 = vshrl.u32 %v201, 7
  %v203 = vsub.s32 6, %v202
  %v204 = vrot.slane %v12, %v203
  %v209 = vlaneseq
  %v210 = vshrl.u32 %v209, 7
  %v211 = vsub.s32 2, %v210
  %v212 = vrot.slane %v192, %v211
  %v213 = vlaneseq
  %v214 = vshrl.u32 %v213, 7
  %v215 = vsub.s32 2, %v214
  %v216 = vrot.slane %v196, %v215
  %v217 = vlaneseq
  %v218 = vshrl.u32 %v217, 7
  %v219 = vsub.s32 2, %v218
  %v220 = vrot.slane %v200, %v219
  %v221 = vlaneseq
  %v222 = vshrl.u32 %v221, 7
  %v223 = vsub.s32 2, %v222
  %v224 = vrot.slane %v204, %v223
  %v225 = vmul.f32 %v179, %v212
  %v226 = vmul.f32 %v179, %v216
  %v227 = vmul.f32 %v179, %v220
  %v228 = vmul.f32 %v179, %v224
  %v229 = vmul.f32 %v183, %v212
  %v230 = vmul.f32 %v183, %v216
  %v231 = vmul.f32 %v183, %v220
  %v232 = vmul.f32 %v183, %v224
  %v233 = vmul.f32 %v187, %v212
  %v234 = vmul.f32 %v187, %v216
  %v235 = vmul.f32 %v187, %v220
  %v236 = vmul.f32 %v187, %v224
  %v237 = vadd.f32 %v165, %v225
  %v238 = vadd.f32 %v166, %v226
  %v239 = vadd.f32 %v167, %v227
  %v240 = vadd.f32 %v168, %v228
  %v241 = vadd.f32 %v169, %v229
  %v242 = vadd.f32 %v170, %v230
  %v243 = vadd.f32 %v171, %v231
  %v244 = vadd.f32 %v172, %v232
  %v245 = vadd.f32 %v173, %v233
  %v246 = vadd.f32 %v174, %v234
  %v247 = vadd.f32 %v175, %v235
  %v248 = vadd.f32 %v176, %v236
  %249 = vset.pattern.permute.xlu0 3
  %250 = vperm.xlu0 %249, %v13
  %v251 = vpop.permute.xlu0 %250
  %253 = vset.pattern.permute.xlu0 3
  %254 = vperm.xlu0 %253, %v14
  %v255 = vpop.permute.xlu0 %254
  %257 = vset.pattern.permute.xlu0 3
  %258 = vperm.xlu0 %257, %v15
  %v259 = vpop.permute.xlu0 %258
  %v261 = vlaneseq
  %v262 = vshrl.u32 %v261, 7
  %v263 = vsub.s32 3, %v262
  %v264 = vrot.slane %v11, %v263
  %v265 = vlaneseq
  %v266 = vshrl.u32 %v265, 7
  %v267 = vsub.s32 7, %v266
  %v268 = vrot.slane %v11, %v267
  %v269 = vlaneseq
  %v270 = vshrl.u32 %v269, 7
  %v271 = vsub.s32 3, %v270
  %v272 = vrot.slane %v12, %v271
  %v273 = vlaneseq
  %v274 = vshrl.u32 %v273, 7
  %v275 = vsub.s32 7, %v274
  %v276 = vrot.slane %v12, %v275
  %v281 = vlaneseq
  %v282 = vshrl.u32 %v281, 7
  %v283 = vsub.s32 3, %v282
  %v284 = vrot.slane %v264, %v283
  %v285 = vlaneseq
  %v286 = vshrl.u32 %v285, 7
  %v287 = vsub.s32 3, %v286
  %v288 = vrot.slane %v268, %v287
  %v289 = vlaneseq
  %v290 = vshrl.u32 %v289, 7
  %v291 = vsub.s32 3, %v290
  %v292 = vrot.slane %v272, %v291
  %v293 = vlaneseq
  %v294 = vshrl.u32 %v293, 7
  %v295 = vsub.s32 3, %v294
  %v296 = vrot.slane %v276, %v295
  %v297 = vmul.f32 %v251, %v284
  %v298 = vmul.f32 %v251, %v288
  %v299 = vmul.f32 %v251, %v292
  %v300 = vmul.f32 %v251, %v296
  %v301 = vmul.f32 %v255, %v284
  %v302 = vmul.f32 %v255, %v288
  %v303 = vmul.f32 %v255, %v292
  %v304 = vmul.f32 %v255, %v296
  %v305 = vmul.f32 %v259, %v284
  %v306 = vmul.f32 %v259, %v288
  %v307 = vmul.f32 %v259, %v292
  %v308 = vmul.f32 %v259, %v296
  %v309 = vadd.f32 %v237, %v297
  %v310 = vadd.f32 %v238, %v298
  %v311 = vadd.f32 %v239, %v299
  %v312 = vadd.f32 %v240, %v300
  %v313 = vadd.f32 %v241, %v301
  %v314 = vadd.f32 %v242, %v302
  %v315 = vadd.f32 %v243, %v303
  %v316 = vadd.f32 %v244, %v304
  %v317 = vadd.f32 %v245, %v305
  %v318 = vadd.f32 %v246, %v306
  %v319 = vadd.f32 %v247, %v307
  %v320 = vadd.f32 %v248, %v308
  %v321 = vmax.f32 %v309, 0.0
  %v322 = vmax.f32 %v310, 0.0
  %v323 = vmax.f32 %v311, 0.0
  %v324 = vmax.f32 %v312, 0.0
  %v325 = vmax.f32 %v313, 0.0
  %v326 = vmax.f32 %v314, 0.0
  %v327 = vmax.f32 %v315, 0.0
  %v328 = vmax.f32 %v316, 0.0
  %v329 = vld [vmem:[%s1 + $0x20] sm:$0xff]
  %v330 = vld [vmem:[%s1 + $0x40] sm:$0xff]
  %331 = vrot.lane.b32.xlu0 %v321, 17
  %v332 = vpop.permute.xlu0 %331
  %333 = vrot.lane.b32.xlu0 %v325, 17
  %v334 = vpop.permute.xlu0 %333
  %335 = vrot.lane.b32.xlu0 %v322, 17
  %v336 = vpop.permute.xlu0 %335
  %337 = vrot.lane.b32.xlu0 %v326, 17
  %v338 = vpop.permute.xlu0 %337
  %339 = vrot.lane.b32.xlu0 %v323, 17
  %v340 = vpop.permute.xlu0 %339
  %341 = vrot.lane.b32.xlu0 %v327, 17
  %v342 = vpop.permute.xlu0 %341
  %343 = vrot.lane.b32.xlu0 %v324, 17
  %v344 = vpop.permute.xlu0 %343
  %345 = vrot.lane.b32.xlu0 %v328, 17
  %v346 = vpop.permute.xlu0 %345
  %v347 = vlaneseq
  %v348 = vand.u32 %v347, 127
  %vm349 = vcmp.lt.s32.totalorder %v348, 17
  %v350 = vsel %vm349, %v340, %v344
  %v351 = vsel %vm349, %v342, %v346
  %v352 = vsel %vm349, %v336, %v340
  %v353 = vsel %vm349, %v338, %v342
  %v354 = vsel %vm349, %v332, %v336
  %v355 = vsel %vm349, %v334, %v338
  %v356 = vsel %vm349, %v344, %v332
  %v357 = vsel %vm349, %v346, %v334
  %v358 = vld [vmem:[%s1] ss:$8 sm:$0xf]
  %v360 = vlaneseq
  %v361 = vshrl.u32 %v360, 7
  %v362 = vsub.s32 0, %v361
  %v363 = vrot.slane %v358, %v362
  %v364 = vlaneseq
  %v365 = vshrl.u32 %v364, 7
  %v366 = vsub.s32 1, %v365
  %v367 = vrot.slane %v358, %v366
  %v368 = vlaneseq
  %v369 = vshrl.u32 %v368, 7
  %v370 = vsub.s32 2, %v369
  %v371 = vrot.slane %v358, %v370
  %v372 = vlaneseq
  %v373 = vshrl.u32 %v372, 7
  %v374 = vsub.s32 3, %v373
  %v375 = vrot.slane %v358, %v374
  %v380 = vmul.f32 %v356, %v363
  %v381 = vmul.f32 %v354, %v367
  %v382 = vmul.f32 %v352, %v371
  %v383 = vmul.f32 %v350, %v375
  %v384 = vmul.f32 %v357, %v363
  %v385 = vmul.f32 %v355, %v367
  %v386 = vmul.f32 %v353, %v371
  %v387 = vmul.f32 %v351, %v375
  %389 = vset.pattern.permute.xlu0 8
  %390 = vperm.xlu0 %389, %v329
  %v391 = vpop.permute.xlu0 %390
  %394 = vset.pattern.permute.xlu0 8
  %395 = vperm.xlu0 %394, %v330
  %v396 = vpop.permute.xlu0 %395
  %v398 = vmul.f32 %v380, %v391
  %v399 = vmul.f32 %v381, %v391
  %v400 = vmul.f32 %v382, %v391
  %v401 = vmul.f32 %v383, %v391
  %v402 = vmul.f32 %v384, %v396
  %v403 = vmul.f32 %v385, %v396
  %v404 = vmul.f32 %v386, %v396
  %v405 = vmul.f32 %v387, %v396
  %406 = vset.pattern.permute.xlu0 17
  %407 = vperm.xlu0 %406, %v329
  %v408 = vpop.permute.xlu0 %407
  %410 = vset.pattern.permute.xlu0 17
  %411 = vperm.xlu0 %410, %v330
  %v412 = vpop.permute.xlu0 %411
  %v414 = vadd.f32 %v408, %v398
  %v415 = vadd.f32 %v408, %v399
  %v416 = vadd.f32 %v408, %v400
  %v417 = vadd.f32 %v408, %v401
  %v418 = vadd.f32 %v412, %v402
  %v419 = vadd.f32 %v412, %v403
  %v420 = vadd.f32 %v412, %v404
  %v421 = vadd.f32 %v412, %v405
  %422 = vrot.lane.b32.xlu0 %v321, 16
  %v423 = vpop.permute.xlu0 %422
  %424 = vrot.lane.b32.xlu0 %v325, 16
  %v425 = vpop.permute.xlu0 %424
  %426 = vrot.lane.b32.xlu0 %v322, 16
  %v427 = vpop.permute.xlu0 %426
  %428 = vrot.lane.b32.xlu0 %v326, 16
  %v429 = vpop.permute.xlu0 %428
  %430 = vrot.lane.b32.xlu0 %v323, 16
  %v431 = vpop.permute.xlu0 %430
  %432 = vrot.lane.b32.xlu0 %v327, 16
  %v433 = vpop.permute.xlu0 %432
  %434 = vrot.lane.b32.xlu0 %v324, 16
  %v435 = vpop.permute.xlu0 %434
  %436 = vrot.lane.b32.xlu0 %v328, 16
  %v437 = vpop.permute.xlu0 %436
  %vm438 = vcmp.lt.s32.totalorder %v348, 16
  %v439 = vsel %vm438, %v431, %v435
  %v440 = vsel %vm438, %v433, %v437
  %v441 = vsel %vm438, %v427, %v431
  %v442 = vsel %vm438, %v429, %v433
  %v443 = vsel %vm438, %v423, %v427
  %v444 = vsel %vm438, %v425, %v429
  %v445 = vsel %vm438, %v435, %v423
  %v446 = vsel %vm438, %v437, %v425
  %s447 = scalar_lea.vmem %s1, 1
  %v448 = vld [vmem:[%s447] ss:$8 sm:$0xf]
  %v450 = vlaneseq
  %v451 = vshrl.u32 %v450, 7
  %v452 = vsub.s32 0, %v451
  %v453 = vrot.slane %v448, %v452
  %v454 = vlaneseq
  %v455 = vshrl.u32 %v454, 7
  %v456 = vsub.s32 1, %v455
  %v457 = vrot.slane %v448, %v456
  %v458 = vlaneseq
  %v459 = vshrl.u32 %v458, 7
  %v460 = vsub.s32 2, %v459
  %v461 = vrot.slane %v448, %v460
  %v462 = vlaneseq
  %v463 = vshrl.u32 %v462, 7
  %v464 = vsub.s32 3, %v463
  %v465 = vrot.slane %v448, %v464
  %v470 = vmul.f32 %v445, %v453
  %v471 = vmul.f32 %v443, %v457
  %v472 = vmul.f32 %v441, %v461
  %v473 = vmul.f32 %v439, %v465
  %v474 = vmul.f32 %v446, %v453
  %v475 = vmul.f32 %v444, %v457
  %v476 = vmul.f32 %v442, %v461
  %v477 = vmul.f32 %v440, %v465
  %478 = vset.pattern.permute.xlu0 9
  %479 = vperm.xlu0 %478, %v329
  %v480 = vpop.permute.xlu0 %479
  %482 = vset.pattern.permute.xlu0 9
  %483 = vperm.xlu0 %482, %v330
  %v484 = vpop.permute.xlu0 %483
  %v486 = vmul.f32 %v470, %v480
  %v487 = vmul.f32 %v471, %v480
  %v488 = vmul.f32 %v472, %v480
  %v489 = vmul.f32 %v473, %v480
  %v490 = vmul.f32 %v474, %v484
  %v491 = vmul.f32 %v475, %v484
  %v492 = vmul.f32 %v476, %v484
  %v493 = vmul.f32 %v477, %v484
  %v494 = vadd.f32 %v414, %v486
  %v495 = vadd.f32 %v415, %v487
  %v496 = vadd.f32 %v416, %v488
  %v497 = vadd.f32 %v417, %v489
  %v498 = vadd.f32 %v418, %v490
  %v499 = vadd.f32 %v419, %v491
  %v500 = vadd.f32 %v420, %v492
  %v501 = vadd.f32 %v421, %v493
  %502 = vrot.lane.b32.xlu0 %v321, 15
  %v503 = vpop.permute.xlu0 %502
  %504 = vrot.lane.b32.xlu0 %v325, 15
  %v505 = vpop.permute.xlu0 %504
  %506 = vrot.lane.b32.xlu0 %v322, 15
  %v507 = vpop.permute.xlu0 %506
  %508 = vrot.lane.b32.xlu0 %v326, 15
  %v509 = vpop.permute.xlu0 %508
  %510 = vrot.lane.b32.xlu0 %v323, 15
  %v511 = vpop.permute.xlu0 %510
  %512 = vrot.lane.b32.xlu0 %v327, 15
  %v513 = vpop.permute.xlu0 %512
  %514 = vrot.lane.b32.xlu0 %v324, 15
  %v515 = vpop.permute.xlu0 %514
  %516 = vrot.lane.b32.xlu0 %v328, 15
  %v517 = vpop.permute.xlu0 %516
  %vm518 = vcmp.lt.s32.totalorder %v348, 15
  %v519 = vsel %vm518, %v511, %v515
  %v520 = vsel %vm518, %v513, %v517
  %v521 = vsel %vm518, %v507, %v511
  %v522 = vsel %vm518, %v509, %v513
  %v523 = vsel %vm518, %v503, %v507
  %v524 = vsel %vm518, %v505, %v509
  %v525 = vsel %vm518, %v515, %v503
  %v526 = vsel %vm518, %v517, %v505
  %s527 = scalar_lea.vmem %s1, 2
  %v528 = vld [vmem:[%s527] ss:$8 sm:$0xf]
  %v530 = vlaneseq
  %v531 = vshrl.u32 %v530, 7
  %v532 = vsub.s32 0, %v531
  %v533 = vrot.slane %v528, %v532
  %v534 = vlaneseq
  %v535 = vshrl.u32 %v534, 7
  %v536 = vsub.s32 1, %v535
  %v537 = vrot.slane %v528, %v536
  %v538 = vlaneseq
  %v539 = vshrl.u32 %v538, 7
  %v540 = vsub.s32 2, %v539
  %v541 = vrot.slane %v528, %v540
  %v542 = vlaneseq
  %v543 = vshrl.u32 %v542, 7
  %v544 = vsub.s32 3, %v543
  %v545 = vrot.slane %v528, %v544
  %v550 = vmul.f32 %v525, %v533
  %v551 = vmul.f32 %v523, %v537
  %v552 = vmul.f32 %v521, %v541
  %v553 = vmul.f32 %v519, %v545
  %v554 = vmul.f32 %v526, %v533
  %v555 = vmul.f32 %v524, %v537
  %v556 = vmul.f32 %v522, %v541
  %v557 = vmul.f32 %v520, %v545
  %558 = vset.pattern.permute.xlu0 10
  %559 = vperm.xlu0 %558, %v329
  %v560 = vpop.permute.xlu0 %559
  %562 = vset.pattern.permute.xlu0 10
  %563 = vperm.xlu0 %562, %v330
  %v564 = vpop.permute.xlu0 %563
  %v566 = vmul.f32 %v550, %v560
  %v567 = vmul.f32 %v551, %v560
  %v568 = vmul.f32 %v552, %v560
  %v569 = vmul.f32 %v553, %v560
  %v570 = vmul.f32 %v554, %v564
  %v571 = vmul.f32 %v555, %v564
  %v572 = vmul.f32 %v556, %v564
  %v573 = vmul.f32 %v557, %v564
  %v574 = vadd.f32 %v494, %v566
  %v575 = vadd.f32 %v495, %v567
  %v576 = vadd.f32 %v496, %v568
  %v577 = vadd.f32 %v497, %v569
  %v578 = vadd.f32 %v498, %v570
  %v579 = vadd.f32 %v499, %v571
  %v580 = vadd.f32 %v500, %v572
  %v581 = vadd.f32 %v501, %v573
  %582 = vrot.lane.b32.xlu0 %v321, 1
  %v583 = vpop.permute.xlu0 %582
  %584 = vrot.lane.b32.xlu0 %v325, 1
  %v585 = vpop.permute.xlu0 %584
  %586 = vrot.lane.b32.xlu0 %v322, 1
  %v587 = vpop.permute.xlu0 %586
  %588 = vrot.lane.b32.xlu0 %v326, 1
  %v589 = vpop.permute.xlu0 %588
  %590 = vrot.lane.b32.xlu0 %v323, 1
  %v591 = vpop.permute.xlu0 %590
  %592 = vrot.lane.b32.xlu0 %v327, 1
  %v593 = vpop.permute.xlu0 %592
  %594 = vrot.lane.b32.xlu0 %v324, 1
  %v595 = vpop.permute.xlu0 %594
  %596 = vrot.lane.b32.xlu0 %v328, 1
  %v597 = vpop.permute.xlu0 %596
  %vm598 = vcmp.lt.s32.totalorder %v348, 1
  %v599 = vsel %vm598, %v591, %v595
  %v600 = vsel %vm598, %v593, %v597
  %v601 = vsel %vm598, %v587, %v591
  %v602 = vsel %vm598, %v589, %v593
  %v603 = vsel %vm598, %v583, %v587
  %v604 = vsel %vm598, %v585, %v589
  %v605 = vsel %vm598, %v595, %v583
  %v606 = vsel %vm598, %v597, %v585
  %s607 = scalar_lea.vmem %s1, 3
  %v608 = vld [vmem:[%s607] ss:$8 sm:$0xf]
  %v610 = vlaneseq
  %v611 = vshrl.u32 %v610, 7
  %v612 = vsub.s32 0, %v611
  %v613 = vrot.slane %v608, %v612
  %v614 = vlaneseq
  %v615 = vshrl.u32 %v614, 7
  %v616 = vsub.s32 1, %v615
  %v617 = vrot.slane %v608, %v616
  %v618 = vlaneseq
  %v619 = vshrl.u32 %v618, 7
  %v620 = vsub.s32 2, %v619
  %v621 = vrot.slane %v608, %v620
  %v622 = vlaneseq
  %v623 = vshrl.u32 %v622, 7
  %v624 = vsub.s32 3, %v623
  %v625 = vrot.slane %v608, %v624
  %v630 = vmul.f32 %v605, %v613
  %v631 = vmul.f32 %v603, %v617
  %v632 = vmul.f32 %v601, %v621
  %v633 = vmul.f32 %v599, %v625
  %v634 = vmul.f32 %v606, %v613
  %v635 = vmul.f32 %v604, %v617
  %v636 = vmul.f32 %v602, %v621
  %v637 = vmul.f32 %v600, %v625
  %638 = vset.pattern.permute.xlu0 11
  %639 = vperm.xlu0 %638, %v329
  %v640 = vpop.permute.xlu0 %639
  %642 = vset.pattern.permute.xlu0 11
  %643 = vperm.xlu0 %642, %v330
  %v644 = vpop.permute.xlu0 %643
  %v646 = vmul.f32 %v630, %v640
  %v647 = vmul.f32 %v631, %v640
  %v648 = vmul.f32 %v632, %v640
  %v649 = vmul.f32 %v633, %v640
  %v650 = vmul.f32 %v634, %v644
  %v651 = vmul.f32 %v635, %v644
  %v652 = vmul.f32 %v636, %v644
  %v653 = vmul.f32 %v637, %v644
  %v654 = vadd.f32 %v574, %v646
  %v655 = vadd.f32 %v575, %v647
  %v656 = vadd.f32 %v576, %v648
  %v657 = vadd.f32 %v577, %v649
  %v658 = vadd.f32 %v578, %v650
  %v659 = vadd.f32 %v579, %v651
  %v660 = vadd.f32 %v580, %v652
  %v661 = vadd.f32 %v581, %v653
  %662 = vset.pattern.permute.xlu0 12
  %663 = vperm.xlu0 %662, %v329
  %v664 = vpop.permute.xlu0 %663
  %666 = vset.pattern.permute.xlu0 12
  %667 = vperm.xlu0 %666, %v330
  %v668 = vpop.permute.xlu0 %667
  %v670 = vmul.f32 %v321, %v664
  %v671 = vmul.f32 %v322, %v664
  %v672 = vmul.f32 %v323, %v664
  %v673 = vmul.f32 %v324, %v664
  %v674 = vmul.f32 %v325, %v668
  %v675 = vmul.f32 %v326, %v668
  %v676 = vmul.f32 %v327, %v668
  %v677 = vmul.f32 %v328, %v668
  %v678 = vadd.f32 %v654, %v670
  %v679 = vadd.f32 %v655, %v671
  %v680 = vadd.f32 %v656, %v672
  %v681 = vadd.f32 %v657, %v673
  %v682 = vadd.f32 %v658, %v674
  %v683 = vadd.f32 %v659, %v675
  %v684 = vadd.f32 %v660, %v676
  %v685 = vadd.f32 %v661, %v677
  %686 = vrot.lane.b32.xlu0 %v321, 127
  %v687 = vpop.permute.xlu0 %686
  %688 = vrot.lane.b32.xlu0 %v325, 127
  %v689 = vpop.permute.xlu0 %688
  %690 = vrot.lane.b32.xlu0 %v322, 127
  %v691 = vpop.permute.xlu0 %690
  %692 = vrot.lane.b32.xlu0 %v326, 127
  %v693 = vpop.permute.xlu0 %692
  %694 = vrot.lane.b32.xlu0 %v323, 127
  %v695 = vpop.permute.xlu0 %694
  %696 = vrot.lane.b32.xlu0 %v327, 127
  %v697 = vpop.permute.xlu0 %696
  %698 = vrot.lane.b32.xlu0 %v324, 127
  %v699 = vpop.permute.xlu0 %698
  %700 = vrot.lane.b32.xlu0 %v328, 127
  %v701 = vpop.permute.xlu0 %700
  %vm702 = vcmp.lt.s32.totalorder %v348, 127
  %v703 = vsel %vm702, %v695, %v699
  %v704 = vsel %vm702, %v697, %v701
  %v705 = vsel %vm702, %v691, %v695
  %v706 = vsel %vm702, %v693, %v697
  %v707 = vsel %vm702, %v687, %v691
  %v708 = vsel %vm702, %v689, %v693
  %v709 = vsel %vm702, %v699, %v687
  %v710 = vsel %vm702, %v701, %v689
  %s711 = scalar_lea.vmem %s1, 4
  %v712 = vld [vmem:[%s711] ss:$8 sm:$0xf]
  %v714 = vlaneseq
  %v715 = vshrl.u32 %v714, 7
  %v716 = vsub.s32 0, %v715
  %v717 = vrot.slane %v712, %v716
  %v718 = vlaneseq
  %v719 = vshrl.u32 %v718, 7
  %v720 = vsub.s32 1, %v719
  %v721 = vrot.slane %v712, %v720
  %v722 = vlaneseq
  %v723 = vshrl.u32 %v722, 7
  %v724 = vsub.s32 2, %v723
  %v725 = vrot.slane %v712, %v724
  %v726 = vlaneseq
  %v727 = vshrl.u32 %v726, 7
  %v728 = vsub.s32 3, %v727
  %v729 = vrot.slane %v712, %v728
  %v734 = vmul.f32 %v707, %v717
  %v735 = vmul.f32 %v705, %v721
  %v736 = vmul.f32 %v703, %v725
  %v737 = vmul.f32 %v709, %v729
  %v738 = vmul.f32 %v708, %v717
  %v739 = vmul.f32 %v706, %v721
  %v740 = vmul.f32 %v704, %v725
  %v741 = vmul.f32 %v710, %v729
  %742 = vset.pattern.permute.xlu0 13
  %743 = vperm.xlu0 %742, %v329
  %v744 = vpop.permute.xlu0 %743
  %746 = vset.pattern.permute.xlu0 13
  %747 = vperm.xlu0 %746, %v330
  %v748 = vpop.permute.xlu0 %747
  %v750 = vmul.f32 %v734, %v744
  %v751 = vmul.f32 %v735, %v744
  %v752 = vmul.f32 %v736, %v744
  %v753 = vmul.f32 %v737, %v744
  %v754 = vmul.f32 %v738, %v748
  %v755 = vmul.f32 %v739, %v748
  %v756 = vmul.f32 %v740, %v748
  %v757 = vmul.f32 %v741, %v748
  %v758 = vadd.f32 %v678, %v750
  %v759 = vadd.f32 %v679, %v751
  %v760 = vadd.f32 %v680, %v752
  %v761 = vadd.f32 %v681, %v753
  %v762 = vadd.f32 %v682, %v754
  %v763 = vadd.f32 %v683, %v755
  %v764 = vadd.f32 %v684, %v756
  %v765 = vadd.f32 %v685, %v757
  %766 = vrot.lane.b32.xlu0 %v321, 113
  %v767 = vpop.permute.xlu0 %766
  %768 = vrot.lane.b32.xlu0 %v325, 113
  %v769 = vpop.permute.xlu0 %768
  %770 = vrot.lane.b32.xlu0 %v322, 113
  %v771 = vpop.permute.xlu0 %770
  %772 = vrot.lane.b32.xlu0 %v326, 113
  %v773 = vpop.permute.xlu0 %772
  %774 = vrot.lane.b32.xlu0 %v323, 113
  %v775 = vpop.permute.xlu0 %774
  %776 = vrot.lane.b32.xlu0 %v327, 113
  %v777 = vpop.permute.xlu0 %776
  %778 = vrot.lane.b32.xlu0 %v324, 113
  %v779 = vpop.permute.xlu0 %778
  %780 = vrot.lane.b32.xlu0 %v328, 113
  %v781 = vpop.permute.xlu0 %780
  %vm782 = vcmp.lt.s32.totalorder %v348, 113
  %v783 = vsel %vm782, %v775, %v779
  %v784 = vsel %vm782, %v777, %v781
  %v785 = vsel %vm782, %v771, %v775
  %v786 = vsel %vm782, %v773, %v777
  %v787 = vsel %vm782, %v767, %v771
  %v788 = vsel %vm782, %v769, %v773
  %v789 = vsel %vm782, %v779, %v767
  %v790 = vsel %vm782, %v781, %v769
  %s791 = scalar_lea.vmem %s1, 5
  %v792 = vld [vmem:[%s791] ss:$8 sm:$0xf]
  %v794 = vlaneseq
  %v795 = vshrl.u32 %v794, 7
  %v796 = vsub.s32 0, %v795
  %v797 = vrot.slane %v792, %v796
  %v798 = vlaneseq
  %v799 = vshrl.u32 %v798, 7
  %v800 = vsub.s32 1, %v799
  %v801 = vrot.slane %v792, %v800
  %v802 = vlaneseq
  %v803 = vshrl.u32 %v802, 7
  %v804 = vsub.s32 2, %v803
  %v805 = vrot.slane %v792, %v804
  %v806 = vlaneseq
  %v807 = vshrl.u32 %v806, 7
  %v808 = vsub.s32 3, %v807
  %v809 = vrot.slane %v792, %v808
  %v814 = vmul.f32 %v787, %v797
  %v815 = vmul.f32 %v785, %v801
  %v816 = vmul.f32 %v783, %v805
  %v817 = vmul.f32 %v789, %v809
  %v818 = vmul.f32 %v788, %v797
  %v819 = vmul.f32 %v786, %v801
  %v820 = vmul.f32 %v784, %v805
  %v821 = vmul.f32 %v790, %v809
  %822 = vset.pattern.permute.xlu0 14
  %823 = vperm.xlu0 %822, %v329
  %v824 = vpop.permute.xlu0 %823
  %826 = vset.pattern.permute.xlu0 14
  %827 = vperm.xlu0 %826, %v330
  %v828 = vpop.permute.xlu0 %827
  %v830 = vmul.f32 %v814, %v824
  %v831 = vmul.f32 %v815, %v824
  %v832 = vmul.f32 %v816, %v824
  %v833 = vmul.f32 %v817, %v824
  %v834 = vmul.f32 %v818, %v828
  %v835 = vmul.f32 %v819, %v828
  %v836 = vmul.f32 %v820, %v828
  %v837 = vmul.f32 %v821, %v828
  %v838 = vadd.f32 %v758, %v830
  %v839 = vadd.f32 %v759, %v831
  %v840 = vadd.f32 %v760, %v832
  %v841 = vadd.f32 %v761, %v833
  %v842 = vadd.f32 %v762, %v834
  %v843 = vadd.f32 %v763, %v835
  %v844 = vadd.f32 %v764, %v836
  %v845 = vadd.f32 %v765, %v837
  %846 = vrot.lane.b32.xlu0 %v321, 112
  %v847 = vpop.permute.xlu0 %846
  %848 = vrot.lane.b32.xlu0 %v325, 112
  %v849 = vpop.permute.xlu0 %848
  %850 = vrot.lane.b32.xlu0 %v322, 112
  %v851 = vpop.permute.xlu0 %850
  %852 = vrot.lane.b32.xlu0 %v326, 112
  %v853 = vpop.permute.xlu0 %852
  %854 = vrot.lane.b32.xlu0 %v323, 112
  %v855 = vpop.permute.xlu0 %854
  %856 = vrot.lane.b32.xlu0 %v327, 112
  %v857 = vpop.permute.xlu0 %856
  %858 = vrot.lane.b32.xlu0 %v324, 112
  %v859 = vpop.permute.xlu0 %858
  %860 = vrot.lane.b32.xlu0 %v328, 112
  %v861 = vpop.permute.xlu0 %860
  %vm862 = vcmp.lt.s32.totalorder %v348, 112
  %v863 = vsel %vm862, %v855, %v859
  %v864 = vsel %vm862, %v857, %v861
  %v865 = vsel %vm862, %v851, %v855
  %v866 = vsel %vm862, %v853, %v857
  %v867 = vsel %vm862, %v847, %v851
  %v868 = vsel %vm862, %v849, %v853
  %v869 = vsel %vm862, %v859, %v847
  %v870 = vsel %vm862, %v861, %v849
  %s871 = scalar_lea.vmem %s1, 6
  %v872 = vld [vmem:[%s871] ss:$8 sm:$0xf]
  %v874 = vlaneseq
  %v875 = vshrl.u32 %v874, 7
  %v876 = vsub.s32 0, %v875
  %v877 = vrot.slane %v872, %v876
  %v878 = vlaneseq
  %v879 = vshrl.u32 %v878, 7
  %v880 = vsub.s32 1, %v879
  %v881 = vrot.slane %v872, %v880
  %v882 = vlaneseq
  %v883 = vshrl.u32 %v882, 7
  %v884 = vsub.s32 2, %v883
  %v885 = vrot.slane %v872, %v884
  %v886 = vlaneseq
  %v887 = vshrl.u32 %v886, 7
  %v888 = vsub.s32 3, %v887
  %v889 = vrot.slane %v872, %v888
  %v894 = vmul.f32 %v867, %v877
  %v895 = vmul.f32 %v865, %v881
  %v896 = vmul.f32 %v863, %v885
  %v897 = vmul.f32 %v869, %v889
  %v898 = vmul.f32 %v868, %v877
  %v899 = vmul.f32 %v866, %v881
  %v900 = vmul.f32 %v864, %v885
  %v901 = vmul.f32 %v870, %v889
  %902 = vset.pattern.permute.xlu0 15
  %903 = vperm.xlu0 %902, %v329
  %v904 = vpop.permute.xlu0 %903
  %906 = vset.pattern.permute.xlu0 15
  %907 = vperm.xlu0 %906, %v330
  %v908 = vpop.permute.xlu0 %907
  %v910 = vmul.f32 %v894, %v904
  %v911 = vmul.f32 %v895, %v904
  %v912 = vmul.f32 %v896, %v904
  %v913 = vmul.f32 %v897, %v904
  %v914 = vmul.f32 %v898, %v908
  %v915 = vmul.f32 %v899, %v908
  %v916 = vmul.f32 %v900, %v908
  %v917 = vmul.f32 %v901, %v908
  %v918 = vadd.f32 %v838, %v910
  %v919 = vadd.f32 %v839, %v911
  %v920 = vadd.f32 %v840, %v912
  %v921 = vadd.f32 %v841, %v913
  %v922 = vadd.f32 %v842, %v914
  %v923 = vadd.f32 %v843, %v915
  %v924 = vadd.f32 %v844, %v916
  %v925 = vadd.f32 %v845, %v917
  %926 = vrot.lane.b32.xlu0 %v321, 111
  %v927 = vpop.permute.xlu0 %926
  %928 = vrot.lane.b32.xlu0 %v325, 111
  %v929 = vpop.permute.xlu0 %928
  %930 = vrot.lane.b32.xlu0 %v322, 111
  %v931 = vpop.permute.xlu0 %930
  %932 = vrot.lane.b32.xlu0 %v326, 111
  %v933 = vpop.permute.xlu0 %932
  %934 = vrot.lane.b32.xlu0 %v323, 111
  %v935 = vpop.permute.xlu0 %934
  %936 = vrot.lane.b32.xlu0 %v327, 111
  %v937 = vpop.permute.xlu0 %936
  %938 = vrot.lane.b32.xlu0 %v324, 111
  %v939 = vpop.permute.xlu0 %938
  %940 = vrot.lane.b32.xlu0 %v328, 111
  %v941 = vpop.permute.xlu0 %940
  %vm942 = vcmp.lt.s32.totalorder %v348, 111
  %v943 = vsel %vm942, %v935, %v939
  %v944 = vsel %vm942, %v937, %v941
  %v945 = vsel %vm942, %v931, %v935
  %v946 = vsel %vm942, %v933, %v937
  %v947 = vsel %vm942, %v927, %v931
  %v948 = vsel %vm942, %v929, %v933
  %v949 = vsel %vm942, %v939, %v927
  %v950 = vsel %vm942, %v941, %v929
  %s951 = scalar_lea.vmem %s1, 7
  %v952 = vld [vmem:[%s951] ss:$8 sm:$0xf]
  %v954 = vlaneseq
  %v955 = vshrl.u32 %v954, 7
  %v956 = vsub.s32 0, %v955
  %v957 = vrot.slane %v952, %v956
  %v958 = vlaneseq
  %v959 = vshrl.u32 %v958, 7
  %v960 = vsub.s32 1, %v959
  %v961 = vrot.slane %v952, %v960
  %v962 = vlaneseq
  %v963 = vshrl.u32 %v962, 7
  %v964 = vsub.s32 2, %v963
  %v965 = vrot.slane %v952, %v964
  %v966 = vlaneseq
  %v967 = vshrl.u32 %v966, 7
  %v968 = vsub.s32 3, %v967
  %v969 = vrot.slane %v952, %v968
  %v974 = vmul.f32 %v947, %v957
  %v975 = vmul.f32 %v945, %v961
  %v976 = vmul.f32 %v943, %v965
  %v977 = vmul.f32 %v949, %v969
  %v978 = vmul.f32 %v948, %v957
  %v979 = vmul.f32 %v946, %v961
  %v980 = vmul.f32 %v944, %v965
  %v981 = vmul.f32 %v950, %v969
  %982 = vset.pattern.permute.xlu0 16
  %983 = vperm.xlu0 %982, %v329
  %v984 = vpop.permute.xlu0 %983
  %986 = vset.pattern.permute.xlu0 16
  %987 = vperm.xlu0 %986, %v330
  %v988 = vpop.permute.xlu0 %987
  %v990 = vmul.f32 %v974, %v984
  %v991 = vmul.f32 %v975, %v984
  %v992 = vmul.f32 %v976, %v984
  %v993 = vmul.f32 %v977, %v984
  %v994 = vmul.f32 %v978, %v988
  %v995 = vmul.f32 %v979, %v988
  %v996 = vmul.f32 %v980, %v988
  %v997 = vmul.f32 %v981, %v988
  %v998 = vadd.f32 %v918, %v990
  %v999 = vadd.f32 %v919, %v991
  %v1000 = vadd.f32 %v920, %v992
  %v1001 = vadd.f32 %v921, %v993
  %v1002 = vadd.f32 %v922, %v994
  %v1003 = vadd.f32 %v923, %v995
  %v1004 = vadd.f32 %v924, %v996
  %v1005 = vadd.f32 %v925, %v997
  %v1006 = vmax.f32 %v998, 0.0
  %v1007 = vmax.f32 %v999, 0.0
  %v1008 = vmax.f32 %v1000, 0.0
  %v1009 = vmax.f32 %v1001, 0.0
  %v1010 = vmax.f32 %v1002, 0.0
  %v1011 = vmax.f32 %v1003, 0.0
  %v1012 = vmax.f32 %v1004, 0.0
  %v1013 = vmax.f32 %v1005, 0.0
  %v1014 = vld [vmem:[%s1 + $0x20] sm:$0xff]
  %1016 = vset.pattern.permute.xlu0 48
  %1017 = vperm.xlu0 %1016, %v1014
  %v1018 = vpop.permute.xlu0 %1017
  %v1020 = vadd.f32 %v317, %v1018
  %v1021 = vadd.f32 %v318, %v1018
  %v1022 = vadd.f32 %v319, %v1018
  %v1023 = vadd.f32 %v320, %v1018
  %1024 = vset.pattern.permute.xlu0 32
  %1025 = vperm.xlu0 %1024, %v1014
  %v1026 = vpop.permute.xlu0 %1025
  %v1028 = vlaneseq
  %v1029 = vshrl.u32 %v1028, 7
  %v1030 = vsub.s32 0, %v1029
  %v1031 = vrot.slane %v1006, %v1030
  %v1032 = vlaneseq
  %v1033 = vshrl.u32 %v1032, 7
  %v1034 = vsub.s32 0, %v1033
  %v1035 = vrot.slane %v1007, %v1034
  %v1036 = vlaneseq
  %v1037 = vshrl.u32 %v1036, 7
  %v1038 = vsub.s32 0, %v1037
  %v1039 = vrot.slane %v1008, %v1038
  %v1040 = vlaneseq
  %v1041 = vshrl.u32 %v1040, 7
  %v1042 = vsub.s32 0, %v1041
  %v1043 = vrot.slane %v1009, %v1042
  %v1044 = vmul.f32 %v1026, %v1031
  %v1045 = vmul.f32 %v1026, %v1035
  %v1046 = vmul.f32 %v1026, %v1039
  %v1047 = vmul.f32 %v1026, %v1043
  %v1048 = vadd.f32 %v1020, %v1044
  %v1049 = vadd.f32 %v1021, %v1045
  %v1050 = vadd.f32 %v1022, %v1046
  %v1051 = vadd.f32 %v1023, %v1047
  %1052 = vset.pattern.permute.xlu0 33
  %1053 = vperm.xlu0 %1052, %v1014
  %v1054 = vpop.permute.xlu0 %1053
  %v1056 = vlaneseq
  %v1057 = vshrl.u32 %v1056, 7
  %v1058 = vsub.s32 1, %v1057
  %v1059 = vrot.slane %v1006, %v1058
  %v1060 = vlaneseq
  %v1061 = vshrl.u32 %v1060, 7
  %v1062 = vsub.s32 1, %v1061
  %v1063 = vrot.slane %v1007, %v1062
  %v1064 = vlaneseq
  %v1065 = vshrl.u32 %v1064, 7
  %v1066 = vsub.s32 1, %v1065
  %v1067 = vrot.slane %v1008, %v1066
  %v1068 = vlaneseq
  %v1069 = vshrl.u32 %v1068, 7
  %v1070 = vsub.s32 1, %v1069
  %v1071 = vrot.slane %v1009, %v1070
  %v1072 = vmul.f32 %v1054, %v1059
  %v1073 = vmul.f32 %v1054, %v1063
  %v1074 = vmul.f32 %v1054, %v1067
  %v1075 = vmul.f32 %v1054, %v1071
  %v1076 = vadd.f32 %v1048, %v1072
  %v1077 = vadd.f32 %v1049, %v1073
  %v1078 = vadd.f32 %v1050, %v1074
  %v1079 = vadd.f32 %v1051, %v1075
  %1080 = vset.pattern.permute.xlu0 34
  %1081 = vperm.xlu0 %1080, %v1014
  %v1082 = vpop.permute.xlu0 %1081
  %v1084 = vlaneseq
  %v1085 = vshrl.u32 %v1084, 7
  %v1086 = vsub.s32 2, %v1085
  %v1087 = vrot.slane %v1006, %v1086
  %v1088 = vlaneseq
  %v1089 = vshrl.u32 %v1088, 7
  %v1090 = vsub.s32 2, %v1089
  %v1091 = vrot.slane %v1007, %v1090
  %v1092 = vlaneseq
  %v1093 = vshrl.u32 %v1092, 7
  %v1094 = vsub.s32 2, %v1093
  %v1095 = vrot.slane %v1008, %v1094
  %v1096 = vlaneseq
  %v1097 = vshrl.u32 %v1096, 7
  %v1098 = vsub.s32 2, %v1097
  %v1099 = vrot.slane %v1009, %v1098
  %v1100 = vmul.f32 %v1082, %v1087
  %v1101 = vmul.f32 %v1082, %v1091
  %v1102 = vmul.f32 %v1082, %v1095
  %v1103 = vmul.f32 %v1082, %v1099
  %v1104 = vadd.f32 %v1076, %v1100
  %v1105 = vadd.f32 %v1077, %v1101
  %v1106 = vadd.f32 %v1078, %v1102
  %v1107 = vadd.f32 %v1079, %v1103
  %1108 = vset.pattern.permute.xlu0 35
  %1109 = vperm.xlu0 %1108, %v1014
  %v1110 = vpop.permute.xlu0 %1109
  %v1112 = vlaneseq
  %v1113 = vshrl.u32 %v1112, 7
  %v1114 = vsub.s32 3, %v1113
  %v1115 = vrot.slane %v1006, %v1114
  %v1116 = vlaneseq
  %v1117 = vshrl.u32 %v1116, 7
  %v1118 = vsub.s32 3, %v1117
  %v1119 = vrot.slane %v1007, %v1118
  %v1120 = vlaneseq
  %v1121 = vshrl.u32 %v1120, 7
  %v1122 = vsub.s32 3, %v1121
  %v1123 = vrot.slane %v1008, %v1122
  %v1124 = vlaneseq
  %v1125 = vshrl.u32 %v1124, 7
  %v1126 = vsub.s32 3, %v1125
  %v1127 = vrot.slane %v1009, %v1126
  %v1128 = vmul.f32 %v1110, %v1115
  %v1129 = vmul.f32 %v1110, %v1119
  %v1130 = vmul.f32 %v1110, %v1123
  %v1131 = vmul.f32 %v1110, %v1127
  %v1132 = vadd.f32 %v1104, %v1128
  %v1133 = vadd.f32 %v1105, %v1129
  %v1134 = vadd.f32 %v1106, %v1130
  %v1135 = vadd.f32 %v1107, %v1131
  %1136 = vset.pattern.permute.xlu0 36
  %1137 = vperm.xlu0 %1136, %v1014
  %v1138 = vpop.permute.xlu0 %1137
  %v1140 = vlaneseq
  %v1141 = vshrl.u32 %v1140, 7
  %v1142 = vsub.s32 4, %v1141
  %v1143 = vrot.slane %v1006, %v1142
  %v1144 = vlaneseq
  %v1145 = vshrl.u32 %v1144, 7
  %v1146 = vsub.s32 4, %v1145
  %v1147 = vrot.slane %v1007, %v1146
  %v1148 = vlaneseq
  %v1149 = vshrl.u32 %v1148, 7
  %v1150 = vsub.s32 4, %v1149
  %v1151 = vrot.slane %v1008, %v1150
  %v1152 = vlaneseq
  %v1153 = vshrl.u32 %v1152, 7
  %v1154 = vsub.s32 4, %v1153
  %v1155 = vrot.slane %v1009, %v1154
  %v1156 = vmul.f32 %v1138, %v1143
  %v1157 = vmul.f32 %v1138, %v1147
  %v1158 = vmul.f32 %v1138, %v1151
  %v1159 = vmul.f32 %v1138, %v1155
  %v1160 = vadd.f32 %v1132, %v1156
  %v1161 = vadd.f32 %v1133, %v1157
  %v1162 = vadd.f32 %v1134, %v1158
  %v1163 = vadd.f32 %v1135, %v1159
  %1164 = vset.pattern.permute.xlu0 37
  %1165 = vperm.xlu0 %1164, %v1014
  %v1166 = vpop.permute.xlu0 %1165
  %v1168 = vlaneseq
  %v1169 = vshrl.u32 %v1168, 7
  %v1170 = vsub.s32 5, %v1169
  %v1171 = vrot.slane %v1006, %v1170
  %v1172 = vlaneseq
  %v1173 = vshrl.u32 %v1172, 7
  %v1174 = vsub.s32 5, %v1173
  %v1175 = vrot.slane %v1007, %v1174
  %v1176 = vlaneseq
  %v1177 = vshrl.u32 %v1176, 7
  %v1178 = vsub.s32 5, %v1177
  %v1179 = vrot.slane %v1008, %v1178
  %v1180 = vlaneseq
  %v1181 = vshrl.u32 %v1180, 7
  %v1182 = vsub.s32 5, %v1181
  %v1183 = vrot.slane %v1009, %v1182
  %v1184 = vmul.f32 %v1166, %v1171
  %v1185 = vmul.f32 %v1166, %v1175
  %v1186 = vmul.f32 %v1166, %v1179
  %v1187 = vmul.f32 %v1166, %v1183
  %v1188 = vadd.f32 %v1160, %v1184
  %v1189 = vadd.f32 %v1161, %v1185
  %v1190 = vadd.f32 %v1162, %v1186
  %v1191 = vadd.f32 %v1163, %v1187
  %1192 = vset.pattern.permute.xlu0 38
  %1193 = vperm.xlu0 %1192, %v1014
  %v1194 = vpop.permute.xlu0 %1193
  %v1196 = vlaneseq
  %v1197 = vshrl.u32 %v1196, 7
  %v1198 = vsub.s32 6, %v1197
  %v1199 = vrot.slane %v1006, %v1198
  %v1200 = vlaneseq
  %v1201 = vshrl.u32 %v1200, 7
  %v1202 = vsub.s32 6, %v1201
  %v1203 = vrot.slane %v1007, %v1202
  %v1204 = vlaneseq
  %v1205 = vshrl.u32 %v1204, 7
  %v1206 = vsub.s32 6, %v1205
  %v1207 = vrot.slane %v1008, %v1206
  %v1208 = vlaneseq
  %v1209 = vshrl.u32 %v1208, 7
  %v1210 = vsub.s32 6, %v1209
  %v1211 = vrot.slane %v1009, %v1210
  %v1212 = vmul.f32 %v1194, %v1199
  %v1213 = vmul.f32 %v1194, %v1203
  %v1214 = vmul.f32 %v1194, %v1207
  %v1215 = vmul.f32 %v1194, %v1211
  %v1216 = vadd.f32 %v1188, %v1212
  %v1217 = vadd.f32 %v1189, %v1213
  %v1218 = vadd.f32 %v1190, %v1214
  %v1219 = vadd.f32 %v1191, %v1215
  %1220 = vset.pattern.permute.xlu0 39
  %1221 = vperm.xlu0 %1220, %v1014
  %v1222 = vpop.permute.xlu0 %1221
  %v1224 = vlaneseq
  %v1225 = vshrl.u32 %v1224, 7
  %v1226 = vsub.s32 7, %v1225
  %v1227 = vrot.slane %v1006, %v1226
  %v1228 = vlaneseq
  %v1229 = vshrl.u32 %v1228, 7
  %v1230 = vsub.s32 7, %v1229
  %v1231 = vrot.slane %v1007, %v1230
  %v1232 = vlaneseq
  %v1233 = vshrl.u32 %v1232, 7
  %v1234 = vsub.s32 7, %v1233
  %v1235 = vrot.slane %v1008, %v1234
  %v1236 = vlaneseq
  %v1237 = vshrl.u32 %v1236, 7
  %v1238 = vsub.s32 7, %v1237
  %v1239 = vrot.slane %v1009, %v1238
  %v1240 = vmul.f32 %v1222, %v1227
  %v1241 = vmul.f32 %v1222, %v1231
  %v1242 = vmul.f32 %v1222, %v1235
  %v1243 = vmul.f32 %v1222, %v1239
  %v1244 = vadd.f32 %v1216, %v1240
  %v1245 = vadd.f32 %v1217, %v1241
  %v1246 = vadd.f32 %v1218, %v1242
  %v1247 = vadd.f32 %v1219, %v1243
  %1248 = vset.pattern.permute.xlu0 40
  %1249 = vperm.xlu0 %1248, %v1014
  %v1250 = vpop.permute.xlu0 %1249
  %v1252 = vlaneseq
  %v1253 = vshrl.u32 %v1252, 7
  %v1254 = vsub.s32 0, %v1253
  %v1255 = vrot.slane %v1010, %v1254
  %v1256 = vlaneseq
  %v1257 = vshrl.u32 %v1256, 7
  %v1258 = vsub.s32 0, %v1257
  %v1259 = vrot.slane %v1011, %v1258
  %v1260 = vlaneseq
  %v1261 = vshrl.u32 %v1260, 7
  %v1262 = vsub.s32 0, %v1261
  %v1263 = vrot.slane %v1012, %v1262
  %v1264 = vlaneseq
  %v1265 = vshrl.u32 %v1264, 7
  %v1266 = vsub.s32 0, %v1265
  %v1267 = vrot.slane %v1013, %v1266
  %v1268 = vmul.f32 %v1250, %v1255
  %v1269 = vmul.f32 %v1250, %v1259
  %v1270 = vmul.f32 %v1250, %v1263
  %v1271 = vmul.f32 %v1250, %v1267
  %v1272 = vadd.f32 %v1244, %v1268
  %v1273 = vadd.f32 %v1245, %v1269
  %v1274 = vadd.f32 %v1246, %v1270
  %v1275 = vadd.f32 %v1247, %v1271
  %1276 = vset.pattern.permute.xlu0 41
  %1277 = vperm.xlu0 %1276, %v1014
  %v1278 = vpop.permute.xlu0 %1277
  %v1280 = vlaneseq
  %v1281 = vshrl.u32 %v1280, 7
  %v1282 = vsub.s32 1, %v1281
  %v1283 = vrot.slane %v1010, %v1282
  %v1284 = vlaneseq
  %v1285 = vshrl.u32 %v1284, 7
  %v1286 = vsub.s32 1, %v1285
  %v1287 = vrot.slane %v1011, %v1286
  %v1288 = vlaneseq
  %v1289 = vshrl.u32 %v1288, 7
  %v1290 = vsub.s32 1, %v1289
  %v1291 = vrot.slane %v1012, %v1290
  %v1292 = vlaneseq
  %v1293 = vshrl.u32 %v1292, 7
  %v1294 = vsub.s32 1, %v1293
  %v1295 = vrot.slane %v1013, %v1294
  %v1296 = vmul.f32 %v1278, %v1283
  %v1297 = vmul.f32 %v1278, %v1287
  %v1298 = vmul.f32 %v1278, %v1291
  %v1299 = vmul.f32 %v1278, %v1295
  %v1300 = vadd.f32 %v1272, %v1296
  %v1301 = vadd.f32 %v1273, %v1297
  %v1302 = vadd.f32 %v1274, %v1298
  %v1303 = vadd.f32 %v1275, %v1299
  %1304 = vset.pattern.permute.xlu0 42
  %1305 = vperm.xlu0 %1304, %v1014
  %v1306 = vpop.permute.xlu0 %1305
  %v1308 = vlaneseq
  %v1309 = vshrl.u32 %v1308, 7
  %v1310 = vsub.s32 2, %v1309
  %v1311 = vrot.slane %v1010, %v1310
  %v1312 = vlaneseq
  %v1313 = vshrl.u32 %v1312, 7
  %v1314 = vsub.s32 2, %v1313
  %v1315 = vrot.slane %v1011, %v1314
  %v1316 = vlaneseq
  %v1317 = vshrl.u32 %v1316, 7
  %v1318 = vsub.s32 2, %v1317
  %v1319 = vrot.slane %v1012, %v1318
  %v1320 = vlaneseq
  %v1321 = vshrl.u32 %v1320, 7
  %v1322 = vsub.s32 2, %v1321
  %v1323 = vrot.slane %v1013, %v1322
  %v1324 = vmul.f32 %v1306, %v1311
  %v1325 = vmul.f32 %v1306, %v1315
  %v1326 = vmul.f32 %v1306, %v1319
  %v1327 = vmul.f32 %v1306, %v1323
  %v1328 = vadd.f32 %v1300, %v1324
  %v1329 = vadd.f32 %v1301, %v1325
  %v1330 = vadd.f32 %v1302, %v1326
  %v1331 = vadd.f32 %v1303, %v1327
  %1332 = vset.pattern.permute.xlu0 43
  %1333 = vperm.xlu0 %1332, %v1014
  %v1334 = vpop.permute.xlu0 %1333
  %v1336 = vlaneseq
  %v1337 = vshrl.u32 %v1336, 7
  %v1338 = vsub.s32 3, %v1337
  %v1339 = vrot.slane %v1010, %v1338
  %v1340 = vlaneseq
  %v1341 = vshrl.u32 %v1340, 7
  %v1342 = vsub.s32 3, %v1341
  %v1343 = vrot.slane %v1011, %v1342
  %v1344 = vlaneseq
  %v1345 = vshrl.u32 %v1344, 7
  %v1346 = vsub.s32 3, %v1345
  %v1347 = vrot.slane %v1012, %v1346
  %v1348 = vlaneseq
  %v1349 = vshrl.u32 %v1348, 7
  %v1350 = vsub.s32 3, %v1349
  %v1351 = vrot.slane %v1013, %v1350
  %v1352 = vmul.f32 %v1334, %v1339
  %v1353 = vmul.f32 %v1334, %v1343
  %v1354 = vmul.f32 %v1334, %v1347
  %v1355 = vmul.f32 %v1334, %v1351
  %v1356 = vadd.f32 %v1328, %v1352
  %v1357 = vadd.f32 %v1329, %v1353
  %v1358 = vadd.f32 %v1330, %v1354
  %v1359 = vadd.f32 %v1331, %v1355
  %1360 = vset.pattern.permute.xlu0 44
  %1361 = vperm.xlu0 %1360, %v1014
  %v1362 = vpop.permute.xlu0 %1361
  %v1364 = vlaneseq
  %v1365 = vshrl.u32 %v1364, 7
  %v1366 = vsub.s32 4, %v1365
  %v1367 = vrot.slane %v1010, %v1366
  %v1368 = vlaneseq
  %v1369 = vshrl.u32 %v1368, 7
  %v1370 = vsub.s32 4, %v1369
  %v1371 = vrot.slane %v1011, %v1370
  %v1372 = vlaneseq
  %v1373 = vshrl.u32 %v1372, 7
  %v1374 = vsub.s32 4, %v1373
  %v1375 = vrot.slane %v1012, %v1374
  %v1376 = vlaneseq
  %v1377 = vshrl.u32 %v1376, 7
  %v1378 = vsub.s32 4, %v1377
  %v1379 = vrot.slane %v1013, %v1378
  %v1380 = vmul.f32 %v1362, %v1367
  %v1381 = vmul.f32 %v1362, %v1371
  %v1382 = vmul.f32 %v1362, %v1375
  %v1383 = vmul.f32 %v1362, %v1379
  %v1384 = vadd.f32 %v1356, %v1380
  %v1385 = vadd.f32 %v1357, %v1381
  %v1386 = vadd.f32 %v1358, %v1382
  %v1387 = vadd.f32 %v1359, %v1383
  %1388 = vset.pattern.permute.xlu0 45
  %1389 = vperm.xlu0 %1388, %v1014
  %v1390 = vpop.permute.xlu0 %1389
  %v1392 = vlaneseq
  %v1393 = vshrl.u32 %v1392, 7
  %v1394 = vsub.s32 5, %v1393
  %v1395 = vrot.slane %v1010, %v1394
  %v1396 = vlaneseq
  %v1397 = vshrl.u32 %v1396, 7
  %v1398 = vsub.s32 5, %v1397
  %v1399 = vrot.slane %v1011, %v1398
  %v1400 = vlaneseq
  %v1401 = vshrl.u32 %v1400, 7
  %v1402 = vsub.s32 5, %v1401
  %v1403 = vrot.slane %v1012, %v1402
  %v1404 = vlaneseq
  %v1405 = vshrl.u32 %v1404, 7
  %v1406 = vsub.s32 5, %v1405
  %v1407 = vrot.slane %v1013, %v1406
  %v1408 = vmul.f32 %v1390, %v1395
  %v1409 = vmul.f32 %v1390, %v1399
  %v1410 = vmul.f32 %v1390, %v1403
  %v1411 = vmul.f32 %v1390, %v1407
  %v1412 = vadd.f32 %v1384, %v1408
  %v1413 = vadd.f32 %v1385, %v1409
  %v1414 = vadd.f32 %v1386, %v1410
  %v1415 = vadd.f32 %v1387, %v1411
  %1416 = vset.pattern.permute.xlu0 46
  %1417 = vperm.xlu0 %1416, %v1014
  %v1418 = vpop.permute.xlu0 %1417
  %v1420 = vlaneseq
  %v1421 = vshrl.u32 %v1420, 7
  %v1422 = vsub.s32 6, %v1421
  %v1423 = vrot.slane %v1010, %v1422
  %v1424 = vlaneseq
  %v1425 = vshrl.u32 %v1424, 7
  %v1426 = vsub.s32 6, %v1425
  %v1427 = vrot.slane %v1011, %v1426
  %v1428 = vlaneseq
  %v1429 = vshrl.u32 %v1428, 7
  %v1430 = vsub.s32 6, %v1429
  %v1431 = vrot.slane %v1012, %v1430
  %v1432 = vlaneseq
  %v1433 = vshrl.u32 %v1432, 7
  %v1434 = vsub.s32 6, %v1433
  %v1435 = vrot.slane %v1013, %v1434
  %v1436 = vmul.f32 %v1418, %v1423
  %v1437 = vmul.f32 %v1418, %v1427
  %v1438 = vmul.f32 %v1418, %v1431
  %v1439 = vmul.f32 %v1418, %v1435
  %v1440 = vadd.f32 %v1412, %v1436
  %v1441 = vadd.f32 %v1413, %v1437
  %v1442 = vadd.f32 %v1414, %v1438
  %v1443 = vadd.f32 %v1415, %v1439
  %1444 = vset.pattern.permute.xlu0 47
  %1445 = vperm.xlu0 %1444, %v1014
  %v1446 = vpop.permute.xlu0 %1445
  %v1448 = vlaneseq
  %v1449 = vshrl.u32 %v1448, 7
  %v1450 = vsub.s32 7, %v1449
  %v1451 = vrot.slane %v1010, %v1450
  %v1452 = vlaneseq
  %v1453 = vshrl.u32 %v1452, 7
  %v1454 = vsub.s32 7, %v1453
  %v1455 = vrot.slane %v1011, %v1454
  %v1456 = vlaneseq
  %v1457 = vshrl.u32 %v1456, 7
  %v1458 = vsub.s32 7, %v1457
  %v1459 = vrot.slane %v1012, %v1458
  %v1460 = vlaneseq
  %v1461 = vshrl.u32 %v1460, 7
  %v1462 = vsub.s32 7, %v1461
  %v1463 = vrot.slane %v1013, %v1462
  %v1464 = vmul.f32 %v1446, %v1451
  %v1465 = vmul.f32 %v1446, %v1455
  %v1466 = vmul.f32 %v1446, %v1459
  %v1467 = vmul.f32 %v1446, %v1463
  %v1468 = vadd.f32 %v1440, %v1464
  %v1469 = vadd.f32 %v1441, %v1465
  %v1470 = vadd.f32 %v1442, %v1466
  %v1471 = vadd.f32 %v1443, %v1467
  %1472 = vst [vmem:[%s2] sm:$0xff] %v1468
  %1473 = vst [vmem:[%s2 + $0x8] sm:$0xff] %v1469
  %1474 = vst [vmem:[%s2 + $0x10] sm:$0xff] %v1470
  %1475 = vst [vmem:[%s2 + $0x18] sm:$0xff] %v1471
  // Predicated region
  $region10: #{block_forward.1} parent=0 // pred_check
    _
  $region11: #{block_forward.1} parent=0 // pred_check_branch
    %1477 = sbr.rel (0) target = $region13
  $region12: #{block_forward.1} parent=0 // pred_region
    _
  $region13: #{block_forward.1} parent=0 // pred_fallthru
    _
  // Predicated region
  $region14: #{block_forward.1} parent=0 // pred_check
    _
  $region15: #{block_forward.1} parent=0 // pred_check_branch
    %1479 = sbr.rel (0) target = $region17
  $region16: #{block_forward.1} parent=0 // pred_region
    _
  $region17: #{block_forward.1} parent=0 // pred_fallthru
    _

</llo_original>
